<compile_context>
chip_gen: v6e
topology: v6e:2x2x1
jax: 0.10.0
libtpu: 0.0.40
codegen_flags: <defaults>
</compile_context>

<pallas_src>
import jax
import jax.numpy as jnp
from jax.experimental import pallas as pl
from jax.experimental.pallas import tpu as pltpu


def _vmem_capacity_bytes():
    try:
        info = pltpu.get_tpu_info()
        cap = getattr(info, "vmem_capacity_bytes", None)
        if cap:
            return int(cap)
    except Exception:
        pass
    return 64 << 20  # conservative default (v7x-sized VMEM)


def _make_kernel(bt, c_in, nmasks, opg, compute_dtype):
    f32 = jnp.float32
    M = nmasks

    def kernel(x_ref, nt_ref, s1_ref, w_ref, b2_ref, o_ref):
        # x_ref  : (bt, C_in, hw)  input pixels, lane-dense, caller dtype
        # nt_ref : (K, hw)         level*noise*s1 + b1   (K = C_in*nmasks)
        # s1_ref : (K, 1)          BN1 scale
        # w_ref  : (C_out, M)      per-group 1x1 conv weight with BN2 scale folded in
        # b2_ref : (C_out, 1)      conv bias * BN2 scale + BN2 shift
        # o_ref  : (bt, C_out, hw)
        w_all = w_ref[...].astype(compute_dtype)   # hoisted cast (once per step)
        s1 = s1_ref[...]
        b2 = b2_ref[...]
        for b in range(bt):                        # images packed in this grid step
            for g in range(c_in):                  # groups; C_in is tiny for a 1st layer
                # channel replication across its M masks = sublane broadcast + VPU FMA
                xg = x_ref[b, g:g + 1, :].astype(f32)                    # (1, hw)
                y = xg * s1[g * M:(g + 1) * M, :] + nt_ref[g * M:(g + 1) * M, :]
                # TODO(synk): on v6e/v7x the sigmoid itself could run in bf16 (EUP);
                # kept f32 for accuracy and v5e portability.
                y = jax.nn.sigmoid(y)                                    # (M, hw)
                # grouped 1x1 conv: (opg x M) @ (M x hw) on MXU, f32 accumulate
                z = jnp.dot(w_all[g * opg:(g + 1) * opg, :],
                            y.astype(compute_dtype),
                            preferred_element_type=f32)                  # (opg, hw)
                z = z + b2[g * opg:(g + 1) * opg, :]
                o_ref[b, g * opg:(g + 1) * opg, :] = (
                    jax.nn.sigmoid(z).astype(o_ref.dtype))

    return kernel


def perturb_layer_first(x, noise, conv_w, conv_b, bn1, bn2, *, level, nmasks,
                        eps=1e-5, compute_dtype=jnp.float32,
                        out_dtype=jnp.float32, hw_tile=None, batch_tile=None):
    B, C_in, H, W = x.shape
    M = nmasks
    if M == 1:
        # TODO(synk): nmasks == 1 uses groups=1 (dense 1x1 conv mixing all channels).
        raise NotImplementedError("nmasks == 1 (groups=1) path not implemented")
    K = C_in * M
    C_out = conv_w.shape[0]
    assert C_out % C_in == 0, "out_channels must be divisible by in_channels"
    opg = C_out // C_in
    HW = H * W
    f32 = jnp.float32

    # ---- offline parameter folding (plain JAX, computed once) ----
    def fold_bn(params):
        gamma, beta, mean, var = params
        scale = gamma / jnp.sqrt(var + eps)
        shift = beta - mean * scale
        return scale.astype(f32), shift.astype(f32)

    s1, b1 = fold_bn(bn1)                      # (K,)
    s2, b2 = fold_bn(bn2)                      # (C_out,)

    # noise (1, C_in or 1, M, H, W) -> (K, HW), row k = c*M + m; fold level & BN1 in.
    noise_b = jnp.broadcast_to(noise, (1, C_in, M, H, W))[0].reshape(K, HW).astype(f32)
    noise_term = level * noise_b * s1[:, None] + b1[:, None]      # (K, HW)
    s1_col = s1[:, None]                                          # (K, 1)

    # per-group conv weight (C_out, M) with BN2 scale folded in (no block-diag zeros)
    w_scaled = conv_w.reshape(C_out, M).astype(f32) * s2[:, None]
    # conv bias folded into BN2 shift:  (z + bias)*s2 + b2 = (z*? ) -> z' + (bias*s2 + b2)
    b2_col = (conv_b.astype(f32) * s2 + b2)[:, None]              # (C_out, 1)

    # NCHW -> (B, C_in, HW): contiguous reshape, keep caller dtype (bf16 OK)
    x_rows = x.reshape(B, C_in, HW)

    x_isz = x.dtype.itemsize
    o_isz = jnp.dtype(out_dtype).itemsize
    c_isz = jnp.dtype(compute_dtype).itemsize

    # ---- generation-aware VMEM budget ----
    vmem_cap = int(0.75 * _vmem_capacity_bytes())          # ~96 MiB v5e/v6e, ~48 MiB v7x
    vmem_cap = max(16 << 20, min(vmem_cap, 100 << 20))

    bt_target = min(B, max(1, 8 // max(C_in, 1)))           # aim for >=8 sublanes of x

    def vmem_need(hw_t, bt_):
        n_hw = HW // hw_t
        need = bt_ * C_in * hw_t * x_isz * 2                 # x block, double-buffered
        need += bt_ * C_out * hw_t * o_isz * 2               # out block, double-buffered
        need += K * hw_t * 4 * (1 if n_hw == 1 else 2)       # noise_term
        need += (K + C_out * M + C_out) * 4 * 2              # tiny param blocks
        need += (M + C_out) * hw_t * max(4, c_isz)           # in-kernel temporaries
        return need

    # ---- hw tile: largest legal tile that fits the budget ----
    if hw_tile is None:
        cands = sorted({HW} | {d for d in range(128, HW, 128) if HW % d == 0},
                       reverse=True)
        hw_tile = cands[-1]
        for c in cands:
            if vmem_need(c, bt_target) <= vmem_cap:
                hw_tile = c
                break
    assert hw_tile == HW or (HW % hw_tile == 0 and hw_tile % 128 == 0)
    n_hw_tiles = HW // hw_tile

    # ---- batch tile: pack images per step but keep >=2 grid steps when possible ----
    if batch_tile is None:
        batch_tile = 1
        for cand in range(bt_target, 0, -1):
            if B % cand == 0 and (B // cand) * n_hw_tiles >= 2:
                batch_tile = cand
                break
    bt = batch_tile
    assert B % bt == 0
    n_b_tiles = B // bt

    vmem_limit = int(vmem_cap)

    rows = B * HW
    cost = pl.CostEstimate(
        flops=rows * (2 * K + 2 * C_out * M + C_out),
        transcendentals=rows * (K + C_out),
        bytes_accessed=(B * C_in * HW * x_isz + K * HW * 4
                        + (K + C_out * M + C_out) * 4
                        + B * C_out * HW * o_isz),
    )

    kernel = _make_kernel(bt, C_in, M, opg, compute_dtype)

    def run(single_buffer_consts):
        def cspec(shape, imap, constant_index):
            if constant_index and single_buffer_consts:
                return pl.BlockSpec(shape, imap, pipeline_mode=pl.Buffered(1))
            return pl.BlockSpec(shape, imap)

        grid_spec = pltpu.PrefetchScalarGridSpec(
            num_scalar_prefetch=0,
            grid=(n_hw_tiles, n_b_tiles),   # batch innermost: shared blocks never re-DMA
            in_specs=[
                pl.BlockSpec((bt, C_in, hw_tile), lambda t, b: (b, 0, t)),      # x
                cspec((K, hw_tile), lambda t, b: (0, t), n_hw_tiles == 1),      # noise_term
                cspec((K, 1), lambda t, b: (0, 0), True),                       # BN1 scale
                cspec((C_out, M), lambda t, b: (0, 0), True),                   # weight*s2
                cspec((C_out, 1), lambda t, b: (0, 0), True),                   # shift
            ],
            out_specs=pl.BlockSpec((bt, C_out, hw_tile), lambda t, b: (b, 0, t)),
        )
        return pl.pallas_call(
            kernel,
            out_shape=jax.ShapeDtypeStruct((B, C_out, HW), out_dtype),
            grid_spec=grid_spec,
            compiler_params=pltpu.CompilerParams(
                dimension_semantics=("parallel", "parallel"),
                vmem_limit_bytes=vmem_limit),
            cost_estimate=cost,
        )(x_rows, noise_term, s1_col, w_scaled, b2_col)

    try:
        out = run(True)          # single-buffer the constant-index parameter blocks
    except Exception:
        out = run(False)         # fallback if pipeline_mode=pl.Buffered(1) unsupported

    # (B, C_out, HW) is already NCHW order -> free reshape
    return out.reshape(B, C_out, H, W)


def reference(x, noise, conv_w, conv_b, bn1, bn2, *, level, nmasks, eps=1e-5):
    B, C_in, H, W = x.shape
    M = nmasks
    C_out = conv_w.shape[0]
    opg = C_out // C_in
    noise_b = jnp.broadcast_to(noise, (1, C_in, M, H, W))
    y = x[:, :, None, :, :] + level * noise_b
    y = y.reshape(B, C_in * M, H, W)
    g1, be1, m1, v1 = bn1
    y = (y - m1[None, :, None, None]) / jnp.sqrt(v1[None, :, None, None] + eps)
    y = y * g1[None, :, None, None] + be1[None, :, None, None]
    y = jax.nn.sigmoid(y)
    yg = y.reshape(B, C_in, M, H, W)
    wg = conv_w.reshape(C_in, opg, M)
    z = jnp.einsum('bgmhw,gom->bgohw', yg, wg).reshape(B, C_out, H, W)
    z = z + conv_b[None, :, None, None]
    g2, be2, m2, v2 = bn2
    z = (z - m2[None, :, None, None]) / jnp.sqrt(v2[None, :, None, None] + eps)
    z = z * g2[None, :, None, None] + be2[None, :, None, None]
    return jax.nn.sigmoid(z)


if __name__ == "__main__":
    key = jax.random.PRNGKey(0)

    def make_inputs(k, B, C_in, H, M, C_out, unique_masks):
        ks = jax.random.split(k, 12)
        x = jax.random.normal(ks[0], (B, C_in, H, H), jnp.float32)
        noise_channels = C_in if unique_masks else 1
        noise = jax.random.uniform(ks[1], (1, noise_channels, M, H, H),
                                   jnp.float32, minval=-1.0, maxval=1.0)
        conv_w = 0.1 * jax.random.normal(ks[2], (C_out, M, 1, 1), jnp.float32)
        conv_b = 0.01 * jax.random.normal(ks[3], (C_out,), jnp.float32)
        K = C_in * M
        bn1 = (1.0 + 0.1 * jax.random.normal(ks[4], (K,), jnp.float32),
               0.1 * jax.random.normal(ks[5], (K,), jnp.float32),
               0.1 * jax.random.normal(ks[6], (K,), jnp.float32),
               jax.random.uniform(ks[7], (K,), jnp.float32, 0.5, 1.5))
        bn2 = (1.0 + 0.1 * jax.random.normal(ks[8], (C_out,), jnp.float32),
               0.1 * jax.random.normal(ks[9], (C_out,), jnp.float32),
               0.1 * jax.random.normal(ks[10], (C_out,), jnp.float32),
               jax.random.uniform(ks[11], (C_out,), jnp.float32, 0.5, 1.5))
        return x, noise, conv_w, conv_b, bn1, bn2

    k1, k2 = jax.random.split(key)
    level = 0.1

    # --- test 1: module config (filter_size=0): in=4, nmasks=4, out=16, input 16x16, f32 ---
    B, C_in, H, M, C_out = 2, 4, 16, 4, 16
    x, noise, conv_w, conv_b, bn1, bn2 = make_inputs(k1, B, C_in, H, M, C_out, True)
    out = perturb_layer_first(x, noise, conv_w, conv_b, bn1, bn2,
                              level=level, nmasks=M)
    out = jax.block_until_ready(out)
    ref = reference(x, noise, conv_w, conv_b, bn1, bn2, level=level, nmasks=M)
    assert out.shape == (B, C_out, H, H)
    err = float(jnp.max(jnp.abs(out - ref)))
    assert err < 1e-4, err

    # --- test 2: batch-packed step (bt=2) + bf16 input / matmul / output path ---
    B2, C2, H2, M2, Co2 = 4, 4, 16, 8, 16
    x2, noise2, conv_w2, conv_b2, bn1_2, bn2_2 = make_inputs(
        k2, B2, C2, H2, M2, Co2, False)
    x2_bf = x2.astype(jnp.bfloat16)
    out2 = perturb_layer_first(x2_bf, noise2, conv_w2, conv_b2, bn1_2, bn2_2,
                               level=level, nmasks=M2,
                               compute_dtype=jnp.bfloat16, out_dtype=jnp.bfloat16)
    out2 = jax.block_until_ready(out2)
    ref2 = reference(x2_bf.astype(jnp.float32), noise2, conv_w2, conv_b2,
                     bn1_2, bn2_2, level=level, nmasks=M2)
    assert out2.shape == (B2, Co2, H2, H2)
    err2 = float(jnp.max(jnp.abs(out2.astype(jnp.float32) - ref2)))
    assert err2 < 2e-2, err2

    print("KERNEL_OK")
</pallas_src>

<mosaic_0001>
module attributes {stable_mosaic.version = 11 : i64} {
  func.func @kernel(%arg0: i32, %arg1: i32, %arg2: memref<1x4x256xf32, #tpu.memory_space<vmem>>, %arg3: memref<16x256xf32, #tpu.memory_space<vmem>>, %arg4: memref<16x1xf32, #tpu.memory_space<vmem>>, %arg5: memref<16x4xf32, #tpu.memory_space<vmem>>, %arg6: memref<16x1xf32, #tpu.memory_space<vmem>>, %arg7: memref<1x16x256xf32, #tpu.memory_space<vmem>>) attributes {dimension_semantics = [#tpu.dimension_semantics<parallel>, #tpu.dimension_semantics<parallel>], iteration_bounds = array<i64: 1, 2>, scalar_prefetch = 0 : i64, scratch_operands = 0 : i64, tpu.core_type = #tpu.core_type<tc>, window_params = [{transform_indices = @transform_0, window_bounds = array<i64: 1, 4, 256>}, {pipeline_mode = #tpu.pipeline_mode<synchronous>, transform_indices = @transform_1, window_bounds = array<i64: 16, 256>}, {pipeline_mode = #tpu.pipeline_mode<synchronous>, transform_indices = @transform_2, window_bounds = array<i64: 16, 1>}, {pipeline_mode = #tpu.pipeline_mode<synchronous>, transform_indices = @transform_3, window_bounds = array<i64: 16, 4>}, {pipeline_mode = #tpu.pipeline_mode<synchronous>, transform_indices = @transform_4, window_bounds = array<i64: 16, 1>}, {transform_indices = @transform_5, window_bounds = array<i64: 1, 16, 256>}]} {
    %c0 = arith.constant 0 : index
    %c0_0 = arith.constant 0 : index
    %0 = vector.load %arg5[%c0, %c0_0] : memref<16x4xf32, #tpu.memory_space<vmem>>, vector<16x4xf32>
    %c0_1 = arith.constant 0 : index
    %c0_2 = arith.constant 0 : index
    %1 = vector.load %arg4[%c0_1, %c0_2] : memref<16x1xf32, #tpu.memory_space<vmem>>, vector<16x1xf32>
    %c0_3 = arith.constant 0 : index
    %c0_4 = arith.constant 0 : index
    %2 = vector.load %arg6[%c0_3, %c0_4] : memref<16x1xf32, #tpu.memory_space<vmem>>, vector<16x1xf32>
    %c0_5 = arith.constant 0 : index
    %c0_6 = arith.constant 0 : index
    %c0_7 = arith.constant 0 : index
    %3 = vector.load %arg2[%c0_5, %c0_6, %c0_7] : memref<1x4x256xf32, #tpu.memory_space<vmem>>, vector<1x1x256xf32>
    %4 = vector.shape_cast %3 : vector<1x1x256xf32> to vector<1x256xf32>
    %5 = vector.extract_strided_slice %1 {offsets = [0, 0], sizes = [4, 1], strides = [1, 1]} : vector<16x1xf32> to vector<4x1xf32>
    %6 = vector.broadcast %4 : vector<1x256xf32> to vector<4x256xf32>
    %7 = vector.broadcast %5 : vector<4x1xf32> to vector<4x256xf32>
    %8 = arith.mulf %6, %7 : vector<4x256xf32>
    %c0_8 = arith.constant 0 : index
    %c0_9 = arith.constant 0 : index
    %9 = vector.load %arg3[%c0_8, %c0_9] : memref<16x256xf32, #tpu.memory_space<vmem>>, vector<4x256xf32>
    %10 = arith.addf %8, %9 : vector<4x256xf32>
    %11 = arith.negf %10 : vector<4x256xf32>
    %12 = math.exp %11 : vector<4x256xf32>
    %cst = arith.constant 1.000000e+00 : f32
    %13 = vector.broadcast %cst : f32 to vector<4x256xf32>
    %14 = arith.addf %13, %12 : vector<4x256xf32>
    %15 = arith.divf %13, %14 : vector<4x256xf32>
    %16 = vector.extract_strided_slice %0 {offsets = [0, 0], sizes = [4, 4], strides = [1, 1]} : vector<16x4xf32> to vector<4x4xf32>
    %cst_10 = arith.constant dense<0.000000e+00> : vector<4x256xf32>
    %17 = tpu.matmul %16, %15, %cst_10 {dimension_numbers = #tpu.dot_dimension_numbers<[1], [0], [0], [1], [0, 0, 1, 1], [], []>} : vector<4x4xf32>, vector<4x256xf32>, vector<4x256xf32> -> vector<4x256xf32>
    %18 = vector.extract_strided_slice %2 {offsets = [0, 0], sizes = [4, 1], strides = [1, 1]} : vector<16x1xf32> to vector<4x1xf32>
    %19 = vector.broadcast %18 : vector<4x1xf32> to vector<4x256xf32>
    %20 = arith.addf %17, %19 : vector<4x256xf32>
    %21 = arith.negf %20 : vector<4x256xf32>
    %22 = math.exp %21 : vector<4x256xf32>
    %cst_11 = arith.constant 1.000000e+00 : f32
    %23 = vector.broadcast %cst_11 : f32 to vector<4x256xf32>
    %24 = arith.addf %23, %22 : vector<4x256xf32>
    %25 = arith.divf %23, %24 : vector<4x256xf32>
    %c0_12 = arith.constant 0 : index
    %c0_13 = arith.constant 0 : index
    %c0_14 = arith.constant 0 : index
    %26 = vector.load %arg7[%c0_12, %c0_13, %c0_14] : memref<1x16x256xf32, #tpu.memory_space<vmem>>, vector<1x4x256xf32>
    %27 = vector.shape_cast %26 : vector<1x4x256xf32> to vector<4x256xf32>
    %28 = vector.shape_cast %25 : vector<4x256xf32> to vector<1x4x256xf32>
    tpu.vector_store %arg7[%c0_12, %c0_13, %c0_14], %28 {strides = array<i32>} : memref<1x16x256xf32, #tpu.memory_space<vmem>>, vector<1x4x256xf32>,
    %c0_15 = arith.constant 0 : index
    %c1 = arith.constant 1 : index
    %c0_16 = arith.constant 0 : index
    %29 = vector.load %arg2[%c0_15, %c1, %c0_16] : memref<1x4x256xf32, #tpu.memory_space<vmem>>, vector<1x1x256xf32>
    %30 = vector.shape_cast %29 : vector<1x1x256xf32> to vector<1x256xf32>
    %31 = vector.extract_strided_slice %1 {offsets = [4, 0], sizes = [4, 1], strides = [1, 1]} : vector<16x1xf32> to vector<4x1xf32>
    %32 = vector.broadcast %30 : vector<1x256xf32> to vector<4x256xf32>
    %33 = vector.broadcast %31 : vector<4x1xf32> to vector<4x256xf32>
    %34 = arith.mulf %32, %33 : vector<4x256xf32>
    %c4 = arith.constant 4 : index
    %c0_17 = arith.constant 0 : index
    %35 = vector.load %arg3[%c4, %c0_17] : memref<16x256xf32, #tpu.memory_space<vmem>>, vector<4x256xf32>
    %36 = arith.addf %34, %35 : vector<4x256xf32>
    %37 = arith.negf %36 : vector<4x256xf32>
    %38 = math.exp %37 : vector<4x256xf32>
    %cst_18 = arith.constant 1.000000e+00 : f32
    %39 = vector.broadcast %cst_18 : f32 to vector<4x256xf32>
    %40 = arith.addf %39, %38 : vector<4x256xf32>
    %41 = arith.divf %39, %40 : vector<4x256xf32>
    %42 = vector.extract_strided_slice %0 {offsets = [4, 0], sizes = [4, 4], strides = [1, 1]} : vector<16x4xf32> to vector<4x4xf32>
    %cst_19 = arith.constant dense<0.000000e+00> : vector<4x256xf32>
    %43 = tpu.matmul %42, %41, %cst_19 {dimension_numbers = #tpu.dot_dimension_numbers<[1], [0], [0], [1], [0, 0, 1, 1], [], []>} : vector<4x4xf32>, vector<4x256xf32>, vector<4x256xf32> -> vector<4x256xf32>
    %44 = vector.extract_strided_slice %2 {offsets = [4, 0], sizes = [4, 1], strides = [1, 1]} : vector<16x1xf32> to vector<4x1xf32>
    %45 = vector.broadcast %44 : vector<4x1xf32> to vector<4x256xf32>
    %46 = arith.addf %43, %45 : vector<4x256xf32>
    %47 = arith.negf %46 : vector<4x256xf32>
    %48 = math.exp %47 : vector<4x256xf32>
    %cst_20 = arith.constant 1.000000e+00 : f32
    %49 = vector.broadcast %cst_20 : f32 to vector<4x256xf32>
    %50 = arith.addf %49, %48 : vector<4x256xf32>
    %51 = arith.divf %49, %50 : vector<4x256xf32>
    %c0_21 = arith.constant 0 : index
    %c4_22 = arith.constant 4 : index
    %c0_23 = arith.constant 0 : index
    %52 = vector.load %arg7[%c0_21, %c4_22, %c0_23] : memref<1x16x256xf32, #tpu.memory_space<vmem>>, vector<1x4x256xf32>
    %53 = vector.shape_cast %52 : vector<1x4x256xf32> to vector<4x256xf32>
    %54 = vector.shape_cast %51 : vector<4x256xf32> to vector<1x4x256xf32>
    tpu.vector_store %arg7[%c0_21, %c4_22, %c0_23], %54 {strides = array<i32>} : memref<1x16x256xf32, #tpu.memory_space<vmem>>, vector<1x4x256xf32>,
    %c0_24 = arith.constant 0 : index
    %c2 = arith.constant 2 : index
    %c0_25 = arith.constant 0 : index
    %55 = vector.load %arg2[%c0_24, %c2, %c0_25] : memref<1x4x256xf32, #tpu.memory_space<vmem>>, vector<1x1x256xf32>
    %56 = vector.shape_cast %55 : vector<1x1x256xf32> to vector<1x256xf32>
    %57 = vector.extract_strided_slice %1 {offsets = [8, 0], sizes = [4, 1], strides = [1, 1]} : vector<16x1xf32> to vector<4x1xf32>
    %58 = vector.broadcast %56 : vector<1x256xf32> to vector<4x256xf32>
    %59 = vector.broadcast %57 : vector<4x1xf32> to vector<4x256xf32>
    %60 = arith.mulf %58, %59 : vector<4x256xf32>
    %c8 = arith.constant 8 : index
    %c0_26 = arith.constant 0 : index
    %61 = vector.load %arg3[%c8, %c0_26] : memref<16x256xf32, #tpu.memory_space<vmem>>, vector<4x256xf32>
    %62 = arith.addf %60, %61 : vector<4x256xf32>
    %63 = arith.negf %62 : vector<4x256xf32>
    %64 = math.exp %63 : vector<4x256xf32>
    %cst_27 = arith.constant 1.000000e+00 : f32
    %65 = vector.broadcast %cst_27 : f32 to vector<4x256xf32>
    %66 = arith.addf %65, %64 : vector<4x256xf32>
    %67 = arith.divf %65, %66 : vector<4x256xf32>
    %68 = vector.extract_strided_slice %0 {offsets = [8, 0], sizes = [4, 4], strides = [1, 1]} : vector<16x4xf32> to vector<4x4xf32>
    %cst_28 = arith.constant dense<0.000000e+00> : vector<4x256xf32>
    %69 = tpu.matmul %68, %67, %cst_28 {dimension_numbers = #tpu.dot_dimension_numbers<[1], [0], [0], [1], [0, 0, 1, 1], [], []>} : vector<4x4xf32>, vector<4x256xf32>, vector<4x256xf32> -> vector<4x256xf32>
    %70 = vector.extract_strided_slice %2 {offsets = [8, 0], sizes = [4, 1], strides = [1, 1]} : vector<16x1xf32> to vector<4x1xf32>
    %71 = vector.broadcast %70 : vector<4x1xf32> to vector<4x256xf32>
    %72 = arith.addf %69, %71 : vector<4x256xf32>
    %73 = arith.negf %72 : vector<4x256xf32>
    %74 = math.exp %73 : vector<4x256xf32>
    %cst_29 = arith.constant 1.000000e+00 : f32
    %75 = vector.broadcast %cst_29 : f32 to vector<4x256xf32>
    %76 = arith.addf %75, %74 : vector<4x256xf32>
    %77 = arith.divf %75, %76 : vector<4x256xf32>
    %c0_30 = arith.constant 0 : index
    %c8_31 = arith.constant 8 : index
    %c0_32 = arith.constant 0 : index
    %78 = vector.load %arg7[%c0_30, %c8_31, %c0_32] : memref<1x16x256xf32, #tpu.memory_space<vmem>>, vector<1x4x256xf32>
    %79 = vector.shape_cast %78 : vector<1x4x256xf32> to vector<4x256xf32>
    %80 = vector.shape_cast %77 : vector<4x256xf32> to vector<1x4x256xf32>
    tpu.vector_store %arg7[%c0_30, %c8_31, %c0_32], %80 {strides = array<i32>} : memref<1x16x256xf32, #tpu.memory_space<vmem>>, vector<1x4x256xf32>,
    %c0_33 = arith.constant 0 : index
    %c3 = arith.constant 3 : index
    %c0_34 = arith.constant 0 : index
    %81 = vector.load %arg2[%c0_33, %c3, %c0_34] : memref<1x4x256xf32, #tpu.memory_space<vmem>>, vector<1x1x256xf32>
    %82 = vector.shape_cast %81 : vector<1x1x256xf32> to vector<1x256xf32>
    %83 = vector.extract_strided_slice %1 {offsets = [12, 0], sizes = [4, 1], strides = [1, 1]} : vector<16x1xf32> to vector<4x1xf32>
    %84 = vector.broadcast %82 : vector<1x256xf32> to vector<4x256xf32>
    %85 = vector.broadcast %83 : vector<4x1xf32> to vector<4x256xf32>
    %86 = arith.mulf %84, %85 : vector<4x256xf32>
    %c12 = arith.constant 12 : index
    %c0_35 = arith.constant 0 : index
    %87 = vector.load %arg3[%c12, %c0_35] : memref<16x256xf32, #tpu.memory_space<vmem>>, vector<4x256xf32>
    %88 = arith.addf %86, %87 : vector<4x256xf32>
    %89 = arith.negf %88 : vector<4x256xf32>
    %90 = math.exp %89 : vector<4x256xf32>
    %cst_36 = arith.constant 1.000000e+00 : f32
    %91 = vector.broadcast %cst_36 : f32 to vector<4x256xf32>
    %92 = arith.addf %91, %90 : vector<4x256xf32>
    %93 = arith.divf %91, %92 : vector<4x256xf32>
    %94 = vector.extract_strided_slice %0 {offsets = [12, 0], sizes = [4, 4], strides = [1, 1]} : vector<16x4xf32> to vector<4x4xf32>
    %cst_37 = arith.constant dense<0.000000e+00> : vector<4x256xf32>
    %95 = tpu.matmul %94, %93, %cst_37 {dimension_numbers = #tpu.dot_dimension_numbers<[1], [0], [0], [1], [0, 0, 1, 1], [], []>} : vector<4x4xf32>, vector<4x256xf32>, vector<4x256xf32> -> vector<4x256xf32>
    %96 = vector.extract_strided_slice %2 {offsets = [12, 0], sizes = [4, 1], strides = [1, 1]} : vector<16x1xf32> to vector<4x1xf32>
    %97 = vector.broadcast %96 : vector<4x1xf32> to vector<4x256xf32>
    %98 = arith.addf %95, %97 : vector<4x256xf32>
    %99 = arith.negf %98 : vector<4x256xf32>
    %100 = math.exp %99 : vector<4x256xf32>
    %cst_38 = arith.constant 1.000000e+00 : f32
    %101 = vector.broadcast %cst_38 : f32 to vector<4x256xf32>
    %102 = arith.addf %101, %100 : vector<4x256xf32>
    %103 = arith.divf %101, %102 : vector<4x256xf32>
    %c0_39 = arith.constant 0 : index
    %c12_40 = arith.constant 12 : index
    %c0_41 = arith.constant 0 : index
    %104 = vector.load %arg7[%c0_39, %c12_40, %c0_41] : memref<1x16x256xf32, #tpu.memory_space<vmem>>, vector<1x4x256xf32>
    %105 = vector.shape_cast %104 : vector<1x4x256xf32> to vector<4x256xf32>
    %106 = vector.shape_cast %103 : vector<4x256xf32> to vector<1x4x256xf32>
    tpu.vector_store %arg7[%c0_39, %c12_40, %c0_41], %106 {strides = array<i32>} : memref<1x16x256xf32, #tpu.memory_space<vmem>>, vector<1x4x256xf32>,
    return
  }
  func.func @transform_0(%arg0: i32, %arg1: i32) -> (i32, i32, i32) {
    %c0_i32 = arith.constant 0 : i32
    %c0_i32_0 = arith.constant 0 : i32
    return %arg1, %c0_i32, %arg0 : i32, i32, i32
  }
  func.func @transform_1(%arg0: i32, %arg1: i32) -> (i32, i32) {
    %c0_i32 = arith.constant 0 : i32
    %c0_i32_0 = arith.constant 0 : i32
    return %c0_i32, %arg0 : i32, i32
  }
  func.func @transform_2(%arg0: i32, %arg1: i32) -> (i32, i32) {
    %c0_i32 = arith.constant 0 : i32
    %c0_i32_0 = arith.constant 0 : i32
    %c0_i32_1 = arith.constant 0 : i32
    return %c0_i32, %c0_i32_0 : i32, i32
  }
  func.func @transform_3(%arg0: i32, %arg1: i32) -> (i32, i32) {
    %c0_i32 = arith.constant 0 : i32
    %c0_i32_0 = arith.constant 0 : i32
    %c0_i32_1 = arith.constant 0 : i32
    return %c0_i32, %c0_i32_0 : i32, i32
  }
  func.func @transform_4(%arg0: i32, %arg1: i32) -> (i32, i32) {
    %c0_i32 = arith.constant 0 : i32
    %c0_i32_0 = arith.constant 0 : i32
    %c0_i32_1 = arith.constant 0 : i32
    return %c0_i32, %c0_i32_0 : i32, i32
  }
  func.func @transform_5(%arg0: i32, %arg1: i32) -> (i32, i32, i32) {
    %c0_i32 = arith.constant 0 : i32
    %c0_i32_0 = arith.constant 0 : i32
    return %arg1, %c0_i32, %arg0 : i32, i32, i32
  }
}

module attributes {stable_mosaic.version = 11 : i64} {
  func.func @kernel(%arg0: i32, %arg1: i32, %arg2: memref<1x4x256xf32, #tpu.memory_space<vmem>>, %arg3: memref<16x256xf32, #tpu.memory_space<vmem>>, %arg4: memref<16x1xf32, #tpu.memory_space<vmem>>, %arg5: memref<16x4xf32, #tpu.memory_space<vmem>>, %arg6: memref<16x1xf32, #tpu.memory_space<vmem>>, %arg7: memref<1x16x256xf32, #tpu.memory_space<vmem>>) attributes {dimension_semantics = [#tpu.dimension_semantics<parallel>, #tpu.dimension_semantics<parallel>], iteration_bounds = array<i64: 1, 2>, scalar_prefetch = 0 : i64, scratch_operands = 0 : i64, tpu.core_type = #tpu.core_type<tc>, window_params = [{transform_indices = @transform_0, window_bounds = array<i64: 1, 4, 256>}, {transform_indices = @transform_1, window_bounds = array<i64: 16, 256>}, {pipeline_mode = #tpu.pipeline_mode<synchronous>, transform_indices = @transform_2, window_bounds = array<i64: 16, 1>}, {pipeline_mode = #tpu.pipeline_mode<synchronous>, transform_indices = @transform_3, window_bounds = array<i64: 16, 4>}, {pipeline_mode = #tpu.pipeline_mode<synchronous>, transform_indices = @transform_4, window_bounds = array<i64: 16, 1>}, {transform_indices = @transform_5, window_bounds = array<i64: 1, 16, 256>}]} {
    %c0 = arith.constant 0 : index
    %c0_0 = arith.constant 0 : index
    %0 = vector.load %arg5[%c0, %c0_0] : memref<16x4xf32, #tpu.memory_space<vmem>>, vector<16x4xf32>
    %c0_1 = arith.constant 0 : index
    %c0_2 = arith.constant 0 : index
    %1 = vector.load %arg4[%c0_1, %c0_2] : memref<16x1xf32, #tpu.memory_space<vmem>>, vector<16x1xf32>
    %c0_3 = arith.constant 0 : index
    %c0_4 = arith.constant 0 : index
    %2 = vector.load %arg6[%c0_3, %c0_4] : memref<16x1xf32, #tpu.memory_space<vmem>>, vector<16x1xf32>
    %c0_5 = arith.constant 0 : index
    %c0_6 = arith.constant 0 : index
    %c0_7 = arith.constant 0 : index
    %3 = vector.load %arg2[%c0_5, %c0_6, %c0_7] : memref<1x4x256xf32, #tpu.memory_space<vmem>>, vector<1x1x256xf32>
    %4 = vector.shape_cast %3 : vector<1x1x256xf32> to vector<1x256xf32>
    %5 = vector.extract_strided_slice %1 {offsets = [0, 0], sizes = [4, 1], strides = [1, 1]} : vector<16x1xf32> to vector<4x1xf32>
    %6 = vector.broadcast %4 : vector<1x256xf32> to vector<4x256xf32>
    %7 = vector.broadcast %5 : vector<4x1xf32> to vector<4x256xf32>
    %8 = arith.mulf %6, %7 : vector<4x256xf32>
    %c0_8 = arith.constant 0 : index
    %c0_9 = arith.constant 0 : index
    %9 = vector.load %arg3[%c0_8, %c0_9] : memref<16x256xf32, #tpu.memory_space<vmem>>, vector<4x256xf32>
    %10 = arith.addf %8, %9 : vector<4x256xf32>
    %11 = arith.negf %10 : vector<4x256xf32>
    %12 = math.exp %11 : vector<4x256xf32>
    %cst = arith.constant 1.000000e+00 : f32
    %13 = vector.broadcast %cst : f32 to vector<4x256xf32>
    %14 = arith.addf %13, %12 : vector<4x256xf32>
    %15 = arith.divf %13, %14 : vector<4x256xf32>
    %16 = vector.extract_strided_slice %0 {offsets = [0, 0], sizes = [4, 4], strides = [1, 1]} : vector<16x4xf32> to vector<4x4xf32>
    %cst_10 = arith.constant dense<0.000000e+00> : vector<4x256xf32>
    %17 = tpu.matmul %16, %15, %cst_10 {dimension_numbers = #tpu.dot_dimension_numbers<[1], [0], [0], [1], [0, 0, 1, 1], [], []>} : vector<4x4xf32>, vector<4x256xf32>, vector<4x256xf32> -> vector<4x256xf32>
    %18 = vector.extract_strided_slice %2 {offsets = [0, 0], sizes = [4, 1], strides = [1, 1]} : vector<16x1xf32> to vector<4x1xf32>
    %19 = vector.broadcast %18 : vector<4x1xf32> to vector<4x256xf32>
    %20 = arith.addf %17, %19 : vector<4x256xf32>
    %21 = arith.negf %20 : vector<4x256xf32>
    %22 = math.exp %21 : vector<4x256xf32>
    %cst_11 = arith.constant 1.000000e+00 : f32
    %23 = vector.broadcast %cst_11 : f32 to vector<4x256xf32>
    %24 = arith.addf %23, %22 : vector<4x256xf32>
    %25 = arith.divf %23, %24 : vector<4x256xf32>
    %c0_12 = arith.constant 0 : index
    %c0_13 = arith.constant 0 : index
    %c0_14 = arith.constant 0 : index
    %26 = vector.load %arg7[%c0_12, %c0_13, %c0_14] : memref<1x16x256xf32, #tpu.memory_space<vmem>>, vector<1x4x256xf32>
    %27 = vector.shape_cast %26 : vector<1x4x256xf32> to vector<4x256xf32>
    %28 = vector.shape_cast %25 : vector<4x256xf32> to vector<1x4x256xf32>
    tpu.vector_store %arg7[%c0_12, %c0_13, %c0_14], %28 {strides = array<i32>} : memref<1x16x256xf32, #tpu.memory_space<vmem>>, vector<1x4x256xf32>,
    %c0_15 = arith.constant 0 : index
    %c1 = arith.constant 1 : index
    %c0_16 = arith.constant 0 : index
    %29 = vector.load %arg2[%c0_15, %c1, %c0_16] : memref<1x4x256xf32, #tpu.memory_space<vmem>>, vector<1x1x256xf32>
    %30 = vector.shape_cast %29 : vector<1x1x256xf32> to vector<1x256xf32>
    %31 = vector.extract_strided_slice %1 {offsets = [4, 0], sizes = [4, 1], strides = [1, 1]} : vector<16x1xf32> to vector<4x1xf32>
    %32 = vector.broadcast %30 : vector<1x256xf32> to vector<4x256xf32>
    %33 = vector.broadcast %31 : vector<4x1xf32> to vector<4x256xf32>
    %34 = arith.mulf %32, %33 : vector<4x256xf32>
    %c4 = arith.constant 4 : index
    %c0_17 = arith.constant 0 : index
    %35 = vector.load %arg3[%c4, %c0_17] : memref<16x256xf32, #tpu.memory_space<vmem>>, vector<4x256xf32>
    %36 = arith.addf %34, %35 : vector<4x256xf32>
    %37 = arith.negf %36 : vector<4x256xf32>
    %38 = math.exp %37 : vector<4x256xf32>
    %cst_18 = arith.constant 1.000000e+00 : f32
    %39 = vector.broadcast %cst_18 : f32 to vector<4x256xf32>
    %40 = arith.addf %39, %38 : vector<4x256xf32>
    %41 = arith.divf %39, %40 : vector<4x256xf32>
    %42 = vector.extract_strided_slice %0 {offsets = [4, 0], sizes = [4, 4], strides = [1, 1]} : vector<16x4xf32> to vector<4x4xf32>
    %cst_19 = arith.constant dense<0.000000e+00> : vector<4x256xf32>
    %43 = tpu.matmul %42, %41, %cst_19 {dimension_numbers = #tpu.dot_dimension_numbers<[1], [0], [0], [1], [0, 0, 1, 1], [], []>} : vector<4x4xf32>, vector<4x256xf32>, vector<4x256xf32> -> vector<4x256xf32>
    %44 = vector.extract_strided_slice %2 {offsets = [4, 0], sizes = [4, 1], strides = [1, 1]} : vector<16x1xf32> to vector<4x1xf32>
    %45 = vector.broadcast %44 : vector<4x1xf32> to vector<4x256xf32>
    %46 = arith.addf %43, %45 : vector<4x256xf32>
    %47 = arith.negf %46 : vector<4x256xf32>
    %48 = math.exp %47 : vector<4x256xf32>
    %cst_20 = arith.constant 1.000000e+00 : f32
    %49 = vector.broadcast %cst_20 : f32 to vector<4x256xf32>
    %50 = arith.addf %49, %48 : vector<4x256xf32>
    %51 = arith.divf %49, %50 : vector<4x256xf32>
    %c0_21 = arith.constant 0 : index
    %c4_22 = arith.constant 4 : index
    %c0_23 = arith.constant 0 : index
    %52 = vector.load %arg7[%c0_21, %c4_22, %c0_23] : memref<1x16x256xf32, #tpu.memory_space<vmem>>, vector<1x4x256xf32>
    %53 = vector.shape_cast %52 : vector<1x4x256xf32> to vector<4x256xf32>
    %54 = vector.shape_cast %51 : vector<4x256xf32> to vector<1x4x256xf32>
    tpu.vector_store %arg7[%c0_21, %c4_22, %c0_23], %54 {strides = array<i32>} : memref<1x16x256xf32, #tpu.memory_space<vmem>>, vector<1x4x256xf32>,
    %c0_24 = arith.constant 0 : index
    %c2 = arith.constant 2 : index
    %c0_25 = arith.constant 0 : index
    %55 = vector.load %arg2[%c0_24, %c2, %c0_25] : memref<1x4x256xf32, #tpu.memory_space<vmem>>, vector<1x1x256xf32>
    %56 = vector.shape_cast %55 : vector<1x1x256xf32> to vector<1x256xf32>
    %57 = vector.extract_strided_slice %1 {offsets = [8, 0], sizes = [4, 1], strides = [1, 1]} : vector<16x1xf32> to vector<4x1xf32>
    %58 = vector.broadcast %56 : vector<1x256xf32> to vector<4x256xf32>
    %59 = vector.broadcast %57 : vector<4x1xf32> to vector<4x256xf32>
    %60 = arith.mulf %58, %59 : vector<4x256xf32>
    %c8 = arith.constant 8 : index
    %c0_26 = arith.constant 0 : index
    %61 = vector.load %arg3[%c8, %c0_26] : memref<16x256xf32, #tpu.memory_space<vmem>>, vector<4x256xf32>
    %62 = arith.addf %60, %61 : vector<4x256xf32>
    %63 = arith.negf %62 : vector<4x256xf32>
    %64 = math.exp %63 : vector<4x256xf32>
    %cst_27 = arith.constant 1.000000e+00 : f32
    %65 = vector.broadcast %cst_27 : f32 to vector<4x256xf32>
    %66 = arith.addf %65, %64 : vector<4x256xf32>
    %67 = arith.divf %65, %66 : vector<4x256xf32>
    %68 = vector.extract_strided_slice %0 {offsets = [8, 0], sizes = [4, 4], strides = [1, 1]} : vector<16x4xf32> to vector<4x4xf32>
    %cst_28 = arith.constant dense<0.000000e+00> : vector<4x256xf32>
    %69 = tpu.matmul %68, %67, %cst_28 {dimension_numbers = #tpu.dot_dimension_numbers<[1], [0], [0], [1], [0, 0, 1, 1], [], []>} : vector<4x4xf32>, vector<4x256xf32>, vector<4x256xf32> -> vector<4x256xf32>
    %70 = vector.extract_strided_slice %2 {offsets = [8, 0], sizes = [4, 1], strides = [1, 1]} : vector<16x1xf32> to vector<4x1xf32>
    %71 = vector.broadcast %70 : vector<4x1xf32> to vector<4x256xf32>
    %72 = arith.addf %69, %71 : vector<4x256xf32>
    %73 = arith.negf %72 : vector<4x256xf32>
    %74 = math.exp %73 : vector<4x256xf32>
    %cst_29 = arith.constant 1.000000e+00 : f32
    %75 = vector.broadcast %cst_29 : f32 to vector<4x256xf32>
    %76 = arith.addf %75, %74 : vector<4x256xf32>
    %77 = arith.divf %75, %76 : vector<4x256xf32>
    %c0_30 = arith.constant 0 : index
    %c8_31 = arith.constant 8 : index
    %c0_32 = arith.constant 0 : index
    %78 = vector.load %arg7[%c0_30, %c8_31, %c0_32] : memref<1x16x256xf32, #tpu.memory_space<vmem>>, vector<1x4x256xf32>
    %79 = vector.shape_cast %78 : vector<1x4x256xf32> to vector<4x256xf32>
    %80 = vector.shape_cast %77 : vector<4x256xf32> to vector<1x4x256xf32>
    tpu.vector_store %arg7[%c0_30, %c8_31, %c0_32], %80 {strides = array<i32>} : memref<1x16x256xf32, #tpu.memory_space<vmem>>, vector<1x4x256xf32>,
    %c0_33 = arith.constant 0 : index
    %c3 = arith.constant 3 : index
    %c0_34 = arith.constant 0 : index
    %81 = vector.load %arg2[%c0_33, %c3, %c0_34] : memref<1x4x256xf32, #tpu.memory_space<vmem>>, vector<1x1x256xf32>
    %82 = vector.shape_cast %81 : vector<1x1x256xf32> to vector<1x256xf32>
    %83 = vector.extract_strided_slice %1 {offsets = [12, 0], sizes = [4, 1], strides = [1, 1]} : vector<16x1xf32> to vector<4x1xf32>
    %84 = vector.broadcast %82 : vector<1x256xf32> to vector<4x256xf32>
    %85 = vector.broadcast %83 : vector<4x1xf32> to vector<4x256xf32>
    %86 = arith.mulf %84, %85 : vector<4x256xf32>
    %c12 = arith.constant 12 : index
    %c0_35 = arith.constant 0 : index
    %87 = vector.load %arg3[%c12, %c0_35] : memref<16x256xf32, #tpu.memory_space<vmem>>, vector<4x256xf32>
    %88 = arith.addf %86, %87 : vector<4x256xf32>
    %89 = arith.negf %88 : vector<4x256xf32>
    %90 = math.exp %89 : vector<4x256xf32>
    %cst_36 = arith.constant 1.000000e+00 : f32
    %91 = vector.broadcast %cst_36 : f32 to vector<4x256xf32>
    %92 = arith.addf %91, %90 : vector<4x256xf32>
    %93 = arith.divf %91, %92 : vector<4x256xf32>
    %94 = vector.extract_strided_slice %0 {offsets = [12, 0], sizes = [4, 4], strides = [1, 1]} : vector<16x4xf32> to vector<4x4xf32>
    %cst_37 = arith.constant dense<0.000000e+00> : vector<4x256xf32>
    %95 = tpu.matmul %94, %93, %cst_37 {dimension_numbers = #tpu.dot_dimension_numbers<[1], [0], [0], [1], [0, 0, 1, 1], [], []>} : vector<4x4xf32>, vector<4x256xf32>, vector<4x256xf32> -> vector<4x256xf32>
    %96 = vector.extract_strided_slice %2 {offsets = [12, 0], sizes = [4, 1], strides = [1, 1]} : vector<16x1xf32> to vector<4x1xf32>
    %97 = vector.broadcast %96 : vector<4x1xf32> to vector<4x256xf32>
    %98 = arith.addf %95, %97 : vector<4x256xf32>
    %99 = arith.negf %98 : vector<4x256xf32>
    %100 = math.exp %99 : vector<4x256xf32>
    %cst_38 = arith.constant 1.000000e+00 : f32
    %101 = vector.broadcast %cst_38 : f32 to vector<4x256xf32>
    %102 = arith.addf %101, %100 : vector<4x256xf32>
    %103 = arith.divf %101, %102 : vector<4x256xf32>
    %c0_39 = arith.constant 0 : index
    %c12_40 = arith.constant 12 : index
    %c0_41 = arith.constant 0 : index
    %104 = vector.load %arg7[%c0_39, %c12_40, %c0_41] : memref<1x16x256xf32, #tpu.memory_space<vmem>>, vector<1x4x256xf32>
    %105 = vector.shape_cast %104 : vector<1x4x256xf32> to vector<4x256xf32>
    %106 = vector.shape_cast %103 : vector<4x256xf32> to vector<1x4x256xf32>
    tpu.vector_store %arg7[%c0_39, %c12_40, %c0_41], %106 {strides = array<i32>} : memref<1x16x256xf32, #tpu.memory_space<vmem>>, vector<1x4x256xf32>,
    return
  }
  func.func @transform_0(%arg0: i32, %arg1: i32) -> (i32, i32, i32) {
    %c0_i32 = arith.constant 0 : i32
    %c0_i32_0 = arith.constant 0 : i32
    return %arg1, %c0_i32, %arg0 : i32, i32, i32
  }
  func.func @transform_1(%arg0: i32, %arg1: i32) -> (i32, i32) {
    %c0_i32 = arith.constant 0 : i32
    %c0_i32_0 = arith.constant 0 : i32
    return %c0_i32, %arg0 : i32, i32
  }
  func.func @transform_2(%arg0: i32, %arg1: i32) -> (i32, i32) {
    %c0_i32 = arith.constant 0 : i32
    %c0_i32_0 = arith.constant 0 : i32
    %c0_i32_1 = arith.constant 0 : i32
    return %c0_i32, %c0_i32_0 : i32, i32
  }
  func.func @transform_3(%arg0: i32, %arg1: i32) -> (i32, i32) {
    %c0_i32 = arith.constant 0 : i32
    %c0_i32_0 = arith.constant 0 : i32
    %c0_i32_1 = arith.constant 0 : i32
    return %c0_i32, %c0_i32_0 : i32, i32
  }
  func.func @transform_4(%arg0: i32, %arg1: i32) -> (i32, i32) {
    %c0_i32 = arith.constant 0 : i32
    %c0_i32_0 = arith.constant 0 : i32
    %c0_i32_1 = arith.constant 0 : i32
    return %c0_i32, %c0_i32_0 : i32, i32
  }
  func.func @transform_5(%arg0: i32, %arg1: i32) -> (i32, i32, i32) {
    %c0_i32 = arith.constant 0 : i32
    %c0_i32_0 = arith.constant 0 : i32
    return %arg1, %c0_i32, %arg0 : i32, i32, i32
  }
}

</mosaic_0001>

<llo_original>
// kernel: tpu_custom_call.1
$region0: #{tpu_custom_call.1}
  #allocation0 [shape = 'u32[]', space=smem, size = 0x4, offset = 0x4, fixed_abs, tag = 'smem constant byte address 0x4 - core index']
  #allocation1 [shape = 'u32[144,128]{1,0:T(1,128)}', space=vmem, size = 0x12000, scoped, tag = 'internal scratch']
  %s0 = inlined_call_operand.vmem [shape: f32[2,4,256], index: 0, kind: input, shape index: {}]
  %s1 = inlined_call_operand.vmem [shape: f32[16,256], index: 1, kind: input, shape index: {}]
  %s2 = inlined_call_operand.vmem [shape: f32[16,1], index: 2, kind: input, shape index: {}]
  %s3 = inlined_call_operand.vmem [shape: f32[16,4], index: 3, kind: input, shape index: {}]
  %s4 = inlined_call_operand.vmem [shape: f32[16,1], index: 4, kind: input, shape index: {}]
  %s5 = inlined_call_operand.hbm [shape: f32[2,16,256], index: 5, kind: output, shape index: {}]
  %s6 = sld [smem:[#allocation0]]
  $region53: #{tpu_custom_call.1} parent=0
    _
  %s8 = ssub.s32 1, %s6
  %s9 = scalar_select 0, %s8, %s6
  $region1: #{tpu_custom_call.1} parent=0
    #allocation2 [shape = 'u8[32768]{0}', space=vmem, size = 0x8000, scoped, tag = 'output window, operand 0']
    #allocation3 [shape = 's32[2]{0}', space=sflag, size = 0x8, scoped, tag = 'scoped memory for tpu_custom_call.1']
    %10 = vsyncpa [#allocation3], 0
    %s11 = scalar_lea.sflag [#allocation3], 1
    %12 = vsyncpa %s11, 0
    loop: start=0, step=1, limit=4
    $region2: #{tpu_custom_call.1} parent=1 // loop_pre_header
      _
    $region3: #{tpu_custom_call.1} parent=1 // loop_header
      %s14 = sphi 0, %s18
      %p15 = scmp.ge.s32.totalorder %s14, 4
      %s21 = sphi 0, %s33
      %s22 = sphi 0, %s29
      %s23 = sphi 0, %s21
      %s24 = sphi 0, %s22
      %s25 = sphi 0, %s23
      %s26 = sphi 0, %s24
      %s38 = sphi 0, %s40
      %s41 = sphi 0, %s38
      %s42 = sphi 0, %s41
      %s58 = sphi 0, %s42
      %s64 = sphi 0, %s66
      %s67 = sphi 0, %s64
      %s68 = sphi 0, %s67
      %s84 = sphi 0, %s68
      %s88 = sphi 0, %s88
      %s90 = sphi 0, %s88
      %s91 = sphi 0, %s90
      %s105 = sphi 0, %s91
      %s109 = sphi 0, %s109
      %s111 = sphi 0, %s109
      %s112 = sphi 0, %s111
      %s126 = sphi 0, %s112
      %s130 = sphi 0, %s130
      %s132 = sphi 0, %s130
      %s133 = sphi 0, %s132
      %s147 = sphi 0, %s133
      %s155 = sphi 0, %s157
      %s158 = sphi 0, %s155
      %s159 = sphi 0, %s158
      %s175 = sphi 0, %s159
    $region4: #{tpu_custom_call.1} parent=1 // loop_header_branch
      %17 = sbr.rel (%p15) target = $region8
    $region5: #{tpu_custom_call.1} parent=1 // loop_body
      %s19 = ssub.s32 %s14, 1
      %s20 = ssub.s32 %s14, 2
      %s27 = sadd.s32 1, %s22
      %p28 = scmp.ge.s32.totalorder %s27, 2
      %s29 = scalar_select %p28, 0, %s27
      %s30 = sadd.s32 1, %s21
      %s31 = scalar_select %p28, %s30, %s21
      %p32 = scmp.ge.s32.totalorder %s31, 1
      %s33 = scalar_select %p32, 0, %s31
      %s34 = ssub.s32 %s22, %s29
      %s35 = ssub.s32 %s21, %s33
      %s36 = sor.u32 %s34, %s35
      %p37 = scmp.eq.s32.totalorder %s36, 0
      %s39 = sadd.s32 %s38, 1
      %s40 = scalar_select %p37, %s38, %s39
      %p43 = pneg %p37
      %p44 = scmp.eq.s32.totalorder %s14, 1
      %p45 = por %p43, %p44
      %p46 = scmp.ne.s32.totalorder %s38, %s41
      %p47 = scmp.eq.s32.totalorder %s14, 0
      %p48 = por %p46, %p47
      %p49 = scmp.ne.s32.totalorder %s38, %s41
      %p50 = scmp.eq.s32.totalorder %s19, 1
      %p51 = por %p49, %p50
      %p52 = scmp.ne.s32.totalorder %s41, %s42
      %p53 = scmp.eq.s32.totalorder %s19, 0
      %p54 = por %p52, %p53
      %p55 = scmp.ne.s32.totalorder %s41, %s42
      %p56 = scmp.eq.s32.totalorder %s20, 1
      %p57 = por %p55, %p56
      %p59 = scmp.ne.s32.totalorder %s42, %s58
      %p60 = scmp.eq.s32.totalorder %s20, 0
      %p61 = por %p59, %p60
      %s62 = ssub.s32 %s21, %s33
      %p63 = scmp.eq.s32.totalorder %s62, 0
      %s65 = sadd.s32 %s64, 1
      %s66 = scalar_select %p63, %s64, %s65
      %p69 = pneg %p63
      %p70 = scmp.eq.s32.totalorder %s14, 1
      %p71 = por %p69, %p70
      %p72 = scmp.ne.s32.totalorder %s64, %s67
      %p73 = scmp.eq.s32.totalorder %s14, 0
      %p74 = por %p72, %p73
      %p75 = scmp.ne.s32.totalorder %s64, %s67
      %p76 = scmp.eq.s32.totalorder %s19, 1
      %p77 = por %p75, %p76
      %p78 = scmp.ne.s32.totalorder %s67, %s68
      %p79 = scmp.eq.s32.totalorder %s19, 0
      %p80 = por %p78, %p79
      %p81 = scmp.ne.s32.totalorder %s67, %s68
      %p82 = scmp.eq.s32.totalorder %s20, 1
      %p83 = por %p81, %p82
      %p85 = scmp.ne.s32.totalorder %s68, %s84
      %p86 = scmp.eq.s32.totalorder %s20, 0
      %p87 = por %p85, %p86
      %s89 = sadd.s32 %s88, 1
      %p92 = scmp.eq.s32.totalorder %s14, 1
      %p93 = scmp.ne.s32.totalorder %s88, %s90
      %p94 = scmp.eq.s32.totalorder %s14, 0
      %p95 = por %p93, %p94
      %p96 = scmp.ne.s32.totalorder %s88, %s90
      %p97 = scmp.eq.s32.totalorder %s19, 1
      %p98 = por %p96, %p97
      %p99 = scmp.ne.s32.totalorder %s90, %s91
      %p100 = scmp.eq.s32.totalorder %s19, 0
      %p101 = por %p99, %p100
      %p102 = scmp.ne.s32.totalorder %s90, %s91
      %p103 = scmp.eq.s32.totalorder %s20, 1
      %p104 = por %p102, %p103
      %p106 = scmp.ne.s32.totalorder %s91, %s105
      %p107 = scmp.eq.s32.totalorder %s20, 0
      %p108 = por %p106, %p107
      %s110 = sadd.s32 %s109, 1
      %p113 = scmp.eq.s32.totalorder %s14, 1
      %p114 = scmp.ne.s32.totalorder %s109, %s111
      %p115 = scmp.eq.s32.totalorder %s14, 0
      %p116 = por %p114, %p115
      %p117 = scmp.ne.s32.totalorder %s109, %s111
      %p118 = scmp.eq.s32.totalorder %s19, 1
      %p119 = por %p117, %p118
      %p120 = scmp.ne.s32.totalorder %s111, %s112
      %p121 = scmp.eq.s32.totalorder %s19, 0
      %p122 = por %p120, %p121
      %p123 = scmp.ne.s32.totalorder %s111, %s112
      %p124 = scmp.eq.s32.totalorder %s20, 1
      %p125 = por %p123, %p124
      %p127 = scmp.ne.s32.totalorder %s112, %s126
      %p128 = scmp.eq.s32.totalorder %s20, 0
      %p129 = por %p127, %p128
      %s131 = sadd.s32 %s130, 1
      %p134 = scmp.eq.s32.totalorder %s14, 1
      %p135 = scmp.ne.s32.totalorder %s130, %s132
      %p136 = scmp.eq.s32.totalorder %s14, 0
      %p137 = por %p135, %p136
      %p138 = scmp.ne.s32.totalorder %s130, %s132
      %p139 = scmp.eq.s32.totalorder %s19, 1
      %p140 = por %p138, %p139
      %p141 = scmp.ne.s32.totalorder %s132, %s133
      %p142 = scmp.eq.s32.totalorder %s19, 0
      %p143 = por %p141, %p142
      %p144 = scmp.ne.s32.totalorder %s132, %s133
      %p145 = scmp.eq.s32.totalorder %s20, 1
      %p146 = por %p144, %p145
      %p148 = scmp.ne.s32.totalorder %s133, %s147
      %p149 = scmp.eq.s32.totalorder %s20, 0
      %p150 = por %p148, %p149
      %s151 = ssub.s32 %s22, %s29
      %s152 = ssub.s32 %s21, %s33
      %s153 = sor.u32 %s151, %s152
      %p154 = scmp.eq.s32.totalorder %s153, 0
      %s156 = sadd.s32 %s155, 1
      %s157 = scalar_select %p154, %s155, %s156
      %p160 = pneg %p154
      %p161 = scmp.eq.s32.totalorder %s14, 1
      %p162 = por %p160, %p161
      %p163 = scmp.ne.s32.totalorder %s155, %s158
      %p164 = scmp.eq.s32.totalorder %s14, 0
      %p165 = por %p163, %p164
      %p166 = scmp.ne.s32.totalorder %s155, %s158
      %p167 = scmp.eq.s32.totalorder %s19, 1
      %p168 = por %p166, %p167
      %p169 = scmp.ne.s32.totalorder %s158, %s159
      %p170 = scmp.eq.s32.totalorder %s19, 0
      %p171 = por %p169, %p170
      %p172 = scmp.ne.s32.totalorder %s158, %s159
      %p173 = scmp.eq.s32.totalorder %s20, 1
      %p174 = por %p172, %p173
      %p176 = scmp.ne.s32.totalorder %s159, %s175
      %p177 = scmp.eq.s32.totalorder %s20, 0
      %p178 = por %p176, %p177
      %p179 = scmp.le.s32.totalorder 1, %s14
      %p180 = scmp.lt.s32.totalorder %s14, 3
      %p181 = pnand %p179, %p180
      %p182 = pneg %p181
      // Predicated region
      $region9: #{tpu_custom_call.1} parent=5 // pred_check
        _
      $region10: #{tpu_custom_call.1} parent=5 // pred_check_branch
        %184 = sbr.rel (%p181) target = $region12
      $region11: #{tpu_custom_call.1} parent=5 // pred_region
        %s185 = ssub.s32 %s14, 1
        // Predicated region
        $region13: #{tpu_custom_call.1} parent=11 // pred_check
          %p186 = pneg %p80
        $region14: #{tpu_custom_call.1} parent=11 // pred_check_branch
          %188 = sbr.rel (%p186) target = $region16
        $region15: #{tpu_custom_call.1} parent=11 // pred_region
          %s189 = smul.u32 2, %s23
          %p190 = scmp.lt.s32.totalorder %s189, 1
          %s191 = scalar_select %p190, %s189, 1
          %s192 = smul.addr %s191, 8
          %s193 = scalar_lea.vmem %s1, %s192
          %s194 = smul.u32 2, %s23
        $region16: #{tpu_custom_call.1} parent=11 // pred_fallthru
          _
        // Predicated region
        $region17: #{tpu_custom_call.1} parent=11 // pred_check
          %p195 = pneg %p101
        $region18: #{tpu_custom_call.1} parent=11 // pred_check_branch
          %197 = sbr.rel (%p195) target = $region20
        $region19: #{tpu_custom_call.1} parent=11 // pred_region
          _
        $region20: #{tpu_custom_call.1} parent=11 // pred_fallthru
          _
        // Predicated region
        $region21: #{tpu_custom_call.1} parent=11 // pred_check
          %p198 = pneg %p122
        $region22: #{tpu_custom_call.1} parent=11 // pred_check_branch
          %200 = sbr.rel (%p198) target = $region24
        $region23: #{tpu_custom_call.1} parent=11 // pred_region
          _
        $region24: #{tpu_custom_call.1} parent=11 // pred_fallthru
          _
        // Predicated region
        $region25: #{tpu_custom_call.1} parent=11 // pred_check
          %p201 = pneg %p143
        $region26: #{tpu_custom_call.1} parent=11 // pred_check_branch
          %203 = sbr.rel (%p201) target = $region28
        $region27: #{tpu_custom_call.1} parent=11 // pred_region
          _
        $region28: #{tpu_custom_call.1} parent=11 // pred_fallthru
          _
      $region12: #{tpu_custom_call.1} parent=5 // pred_fallthru
        _
      %p204 = scmp.lt.s32.totalorder %s14, 2
      // Predicated region
      $region29: #{tpu_custom_call.1} parent=5 // pred_check
        %p205 = pneg %p204
      $region30: #{tpu_custom_call.1} parent=5 // pred_check_branch
        %207 = sbr.rel (%p205) target = $region32
      $region31: #{tpu_custom_call.1} parent=5 // pred_region
        // Predicated region
        $region33: #{tpu_custom_call.1} parent=31 // pred_check
          %p208 = pneg %p48
        $region34: #{tpu_custom_call.1} parent=31 // pred_check_branch
          %210 = sbr.rel (%p208) target = $region36
        $region35: #{tpu_custom_call.1} parent=31 // pred_region
          %s211 = smul.u32 2, %s21
          %p212 = scmp.lt.s32.totalorder %s22, 1
          %s213 = scalar_select %p212, %s22, 1
          %p214 = scmp.lt.s32.totalorder %s211, 1
          %s215 = scalar_select %p214, %s211, 1
          %s216 = smul.addr %s213, 2
          %s217 = sadd.s32 %s215, %s216
          %s218 = smul.addr %s217, 4
          %s219 = scalar_lea.vmem %s0, %s218
          %s220 = smul.u32 2, %s21
        $region36: #{tpu_custom_call.1} parent=31 // pred_fallthru
          _
      $region32: #{tpu_custom_call.1} parent=5 // pred_fallthru
        _
      %p221 = scmp.le.s32.totalorder 1, %s14
      %p222 = scmp.lt.s32.totalorder %s14, 3
      %p223 = pnand %p221, %p222
      %p224 = pneg %p223
      // Predicated region
      $region37: #{tpu_custom_call.1} parent=5 // pred_check
        _
      $region38: #{tpu_custom_call.1} parent=5 // pred_check_branch
        %226 = sbr.rel (%p223) target = $region40
      $region39: #{tpu_custom_call.1} parent=5 // pred_region
        %s227 = ssub.s32 %s14, 1
        %s228 = smul.u32 2, %s23
        %p229 = scmp.lt.s32.totalorder %s24, 1
        %s230 = scalar_select %p229, %s24, 1
        %p231 = scmp.lt.s32.totalorder %s228, 1
        %s232 = scalar_select %p231, %s228, 1
        %s233 = smul.addr %s230, 2
        %s234 = sadd.s32 %s232, %s233
        %s235 = smul.addr %s234, 4
        %s236 = scalar_lea.vmem %s0, %s235
        %p237 = pneg %p54
        %p238 = pneg %p51
        %s239 = smul.u32 2, %s23
        %p240 = scmp.lt.s32.totalorder %s239, 1
        %s241 = scalar_select %p240, %s239, 1
        %s242 = smul.addr %s241, 8
        %s243 = scalar_lea.vmem %s1, %s242
        %p244 = pneg %p80
        %p245 = pneg %p77
        %p246 = pneg %p101
        %p247 = pneg %p98
        %p248 = pneg %p122
        %p249 = pneg %p119
        %p250 = pneg %p143
        %p251 = pneg %p140
        %p252 = pneg %p171
        %p253 = pneg %p168
        %s254 = sand.u32 %s158, 1
        %s255 = scalar_lea.sflag [#allocation3], %s254
        %s256 = sand.u32 %s158, 1
        %s257 = smul.addr %s256, 32
        %s258 = scalar_lea.vmem [#allocation2], %s257
        %s259 = smul.u32 2, %s23
        %p260 = scmp.lt.s32.totalorder %s24, 1
        %s261 = scalar_select %p260, %s24, 1
        %p262 = scmp.lt.s32.totalorder %s259, 1
        %s263 = scalar_select %p262, %s259, 1
        %s264 = smul.addr %s261, 2
        %s265 = sadd.s32 %s263, %s264
        %s266 = smul.addr %s265, 4
        %s267 = scalar_lea.vmem %s0, %s266
        %s268 = smul.u32 2, %s23
        %s269 = smul.u32 2, %s23
        %p270 = scmp.lt.s32.totalorder %s269, 1
        %s271 = scalar_select %p270, %s269, 1
        %s272 = smul.addr %s271, 8
        %s273 = scalar_lea.vmem %s1, %s272
        %s274 = smul.u32 2, %s23
        %s275 = smul.u32 2, %s23
        %v276 = vld [vmem:[%s3] sm:$0xff]
        %v277 = vld [vmem:[%s3 + $0x8] sm:$0xff]
        %v278 = vld [vmem:[%s2] sm:$0xff]
        %v279 = vld [vmem:[%s2 + $0x8] sm:$0xff]
        %v280 = vld [vmem:[%s4] sm:$0xff]
        %v281 = vld [vmem:[%s4 + $0x8] sm:$0xff]
        %v282 = vld [vmem:[%s267] ss:$4 sm:$0x3]
        %v284 = vlaneseq
        %v285 = vshrl.u32 %v284, 7
        %v286 = vsub.s32 0, %v285
        %v287 = vrot.slane %v282, %v286
        %v288 = vlaneseq
        %v289 = vshrl.u32 %v288, 7
        %v290 = vsub.s32 1, %v289
        %v291 = vrot.slane %v282, %v290
        %295 = vset.pattern.permute.xlu0 0
        %296 = vperm.xlu0 %295, %v278
        %v297 = vpop.permute.xlu0 %296
        %v299 = vmul.f32 %v287, %v297
        %v300 = vmul.f32 %v291, %v297
        %v301 = vld [vmem:[%s273] sm:$0xf]
        %v302 = vld [vmem:[%s273 + $0x8] sm:$0xf]
        %v303 = vadd.f32 %v299, %v301
        %v304 = vadd.f32 %v300, %v302
        %v305 = vxor.u32 %v303, 2147483648
        %v306 = vxor.u32 %v304, 2147483648
        %v307 = vmul.f32 %v305, 1.442695
        %v308 = vpow.pop %v307
        %v309 = vmul.f32 %v306, 1.442695
        %v310 = vpow.pop %v309
        %v311 = vadd.f32 %v308, 1.0
        %v312 = vadd.f32 %v310, 1.0
        %v313 = vrcp.pop %v311
        %v314 = vmul.f32 1.0, %v313
        %v315 = vrcp.pop %v312
        %v316 = vmul.f32 1.0, %v315
        %318 = vset.pattern.permute.xlu0 0
        %319 = vperm.xlu0 %318, %v280
        %v320 = vpop.permute.xlu0 %319
        %vm322 = vcmask 31744
        %v324 = vsel %vm322, %v276, 0
        %vm326 = vcmask 1043456
        %v328 = vsel %vm326, %v314, 0
        %v331 = vsel %vm326, %v316, 0
        %333 = vmatprep.subr.mxu0 0.0
        %334 = vmatpush1.msra.mxu0 0.0
        %335 = vmatprep.subr.mxu0 0.0
        %336 = vmatpush1.msra.mxu0 0.0
        %337 = vmatprep.subr.mxu0 0.0
        %338 = vmatpush1.msra.mxu0 0.0
        %339 = vmatprep.subr.mxu0 0.0
        %340 = vmatpush1.msra.mxu0 0.0
        %341 = vmatprep.subr.mxu0 0.0
        %342 = vmatpush1.msra.mxu0 0.0
        %343 = vmatprep.subr.mxu0 0.0
        %344 = vmatpush1.msra.mxu0 0.0
        %345 = vmatprep.subr.mxu0 0.0
        %346 = vmatpush1.msra.mxu0 0.0
        %347 = vmatprep.subr.mxu0 0.0
        %348 = vmatpush1.msra.mxu0 0.0
        %349 = vmatprep.subr.mxu0 0.0
        %350 = vmatpush1.msra.mxu0 0.0
        %351 = vmatprep.subr.mxu0 0.0
        %352 = vmatpush1.msra.mxu0 0.0
        %353 = vmatprep.subr.mxu0 0.0
        %354 = vmatpush1.msra.mxu0 0.0
        %355 = vmatprep.subr.mxu0 0.0
        %356 = vmatpush1.msra.mxu0 0.0
        %357 = vmatprep.subr.mxu0 0.0
        %358 = vmatpush1.msra.mxu0 0.0
        %359 = vmatprep.subr.mxu0 0.0
        %360 = vmatpush1.msra.mxu0 0.0
        %361 = vmatprep.subr.mxu0 0.0
        %362 = vmatpush1.msra.mxu0 0.0
        %363 = vmatprep.subr.mxu0 %v331
        %364 = vmatpush1.msra.mxu0 %v328
        %365 = vmatprep.subr.mxu0 0.0
        %366 = vmatpush2.msra.mxu0 0.0
        %367 = vmatprep.subr.mxu0 0.0
        %368 = vmatpush2.msra.mxu0 0.0
        %369 = vmatprep.subr.mxu0 0.0
        %370 = vmatpush2.msra.mxu0 0.0
        %371 = vmatprep.subr.mxu0 0.0
        %372 = vmatpush2.msra.mxu0 0.0
        %373 = vmatprep.subr.mxu0 0.0
        %374 = vmatpush2.msra.mxu0 0.0
        %375 = vmatprep.subr.mxu0 0.0
        %376 = vmatpush2.msra.mxu0 0.0
        %377 = vmatprep.subr.mxu0 0.0
        %378 = vmatpush2.msra.mxu0 0.0
        %379 = vmatprep.subr.mxu0 0.0
        %380 = vmatpush2.msra.mxu0 0.0
        %381 = vmatprep.subr.mxu0 0.0
        %382 = vmatpush2.msra.mxu0 0.0
        %383 = vmatprep.subr.mxu0 0.0
        %384 = vmatpush2.msra.mxu0 0.0
        %385 = vmatprep.subr.mxu0 0.0
        %386 = vmatpush2.msra.mxu0 0.0
        %387 = vmatprep.subr.mxu0 0.0
        %388 = vmatpush2.msra.mxu0 0.0
        %389 = vmatprep.subr.mxu0 0.0
        %390 = vmatpush2.msra.mxu0 0.0
        %391 = vmatprep.subr.mxu0 0.0
        %392 = vmatpush2.msra.mxu0 0.0
        %393 = vmatprep.subr.mxu0 0.0
        %394 = vmatpush2.msra.mxu0 0.0
        %395 = vmatprep.subr.mxu0 0.0
        %396 = vmatpush2.msra.mxu0 0.0
        %397 = vmatprep.mubr.f32.mxu0 0.0
        %398 = vmatmul.mubr.f32.gmra.mxu0 %v324
        %v399 = vpop.f32.mrf.mxu0
        %v400 = vadd.f32 %v320, %v399
        %v401 = vpop.f32.mrf.mxu0
        %v402 = vadd.f32 %v320, %v401
        %403 = vdwg.mxu0
        %v404 = vxor.u32 %v400, 2147483648
        %v405 = vxor.u32 %v402, 2147483648
        %v406 = vmul.f32 %v404, 1.442695
        %v407 = vpow.pop %v406
        %v408 = vmul.f32 %v405, 1.442695
        %v409 = vpow.pop %v408
        %v410 = vadd.f32 %v407, 1.0
        %v411 = vadd.f32 %v409, 1.0
        %v412 = vrcp.pop %v410
        %v413 = vmul.f32 1.0, %v412
        %v414 = vrcp.pop %v411
        %v415 = vmul.f32 1.0, %v414
        %416 = vst [vmem:[%s258] sm:$0xf] %v413
        %417 = vst [vmem:[%s258 + $0x8] sm:$0xf] %v415
        %s418 = scalar_lea.vmem %s267, 1
        %v419 = vld [vmem:[%s418] ss:$4 sm:$0x3]
        %v421 = vlaneseq
        %v422 = vshrl.u32 %v421, 7
        %v423 = vsub.s32 0, %v422
        %v424 = vrot.slane %v419, %v423
        %v425 = vlaneseq
        %v426 = vshrl.u32 %v425, 7
        %v427 = vsub.s32 1, %v426
        %v428 = vrot.slane %v419, %v427
        %v431 = vmul.f32 %v424, %v297
        %v432 = vmul.f32 %v428, %v297
        %v433 = vld [vmem:[%s273] sm:$0xf0]
        %v434 = vld [vmem:[%s273 + $0x8] sm:$0xf0]
        %v435 = vadd.f32 %v431, %v433
        %v436 = vadd.f32 %v432, %v434
        %v437 = vxor.u32 %v435, 2147483648
        %v438 = vxor.u32 %v436, 2147483648
        %v439 = vmul.f32 %v437, 1.442695
        %v440 = vpow.pop %v439
        %v441 = vmul.f32 %v438, 1.442695
        %v442 = vpow.pop %v441
        %v443 = vadd.f32 %v440, 1.0
        %v444 = vadd.f32 %v442, 1.0
        %v445 = vrcp.pop %v443
        %v446 = vmul.f32 1.0, %v445
        %v447 = vrcp.pop %v444
        %v448 = vmul.f32 1.0, %v447
        %v449 = vrot.slane %v276, 4
        %v452 = vrot.slane %v446, 4
        %v453 = vrot.slane %v448, 4
        %v454 = vrot.slane %v320, 4
        %v456 = vsel %vm322, %v449, 0
        %v458 = vsel %vm326, %v452, 0
        %v460 = vsel %vm326, %v453, 0
        %462 = vmatprep.subr.mxu0 0.0
        %463 = vmatpush1.msra.mxu0 0.0
        %464 = vmatprep.subr.mxu0 0.0
        %465 = vmatpush1.msra.mxu0 0.0
        %466 = vmatprep.subr.mxu0 0.0
        %467 = vmatpush1.msra.mxu0 0.0
        %468 = vmatprep.subr.mxu0 0.0
        %469 = vmatpush1.msra.mxu0 0.0
        %470 = vmatprep.subr.mxu0 0.0
        %471 = vmatpush1.msra.mxu0 0.0
        %472 = vmatprep.subr.mxu0 0.0
        %473 = vmatpush1.msra.mxu0 0.0
        %474 = vmatprep.subr.mxu0 0.0
        %475 = vmatpush1.msra.mxu0 0.0
        %476 = vmatprep.subr.mxu0 0.0
        %477 = vmatpush1.msra.mxu0 0.0
        %478 = vmatprep.subr.mxu0 0.0
        %479 = vmatpush1.msra.mxu0 0.0
        %480 = vmatprep.subr.mxu0 0.0
        %481 = vmatpush1.msra.mxu0 0.0
        %482 = vmatprep.subr.mxu0 0.0
        %483 = vmatpush1.msra.mxu0 0.0
        %484 = vmatprep.subr.mxu0 0.0
        %485 = vmatpush1.msra.mxu0 0.0
        %486 = vmatprep.subr.mxu0 0.0
        %487 = vmatpush1.msra.mxu0 0.0
        %488 = vmatprep.subr.mxu0 0.0
        %489 = vmatpush1.msra.mxu0 0.0
        %490 = vmatprep.subr.mxu0 0.0
        %491 = vmatpush1.msra.mxu0 0.0
        %492 = vmatprep.subr.mxu0 %v460
        %493 = vmatpush1.msra.mxu0 %v458
        %494 = vmatprep.subr.mxu0 0.0
        %495 = vmatpush2.msra.mxu0 0.0
        %496 = vmatprep.subr.mxu0 0.0
        %497 = vmatpush2.msra.mxu0 0.0
        %498 = vmatprep.subr.mxu0 0.0
        %499 = vmatpush2.msra.mxu0 0.0
        %500 = vmatprep.subr.mxu0 0.0
        %501 = vmatpush2.msra.mxu0 0.0
        %502 = vmatprep.subr.mxu0 0.0
        %503 = vmatpush2.msra.mxu0 0.0
        %504 = vmatprep.subr.mxu0 0.0
        %505 = vmatpush2.msra.mxu0 0.0
        %506 = vmatprep.subr.mxu0 0.0
        %507 = vmatpush2.msra.mxu0 0.0
        %508 = vmatprep.subr.mxu0 0.0
        %509 = vmatpush2.msra.mxu0 0.0
        %510 = vmatprep.subr.mxu0 0.0
        %511 = vmatpush2.msra.mxu0 0.0
        %512 = vmatprep.subr.mxu0 0.0
        %513 = vmatpush2.msra.mxu0 0.0
        %514 = vmatprep.subr.mxu0 0.0
        %515 = vmatpush2.msra.mxu0 0.0
        %516 = vmatprep.subr.mxu0 0.0
        %517 = vmatpush2.msra.mxu0 0.0
        %518 = vmatprep.subr.mxu0 0.0
        %519 = vmatpush2.msra.mxu0 0.0
        %520 = vmatprep.subr.mxu0 0.0
        %521 = vmatpush2.msra.mxu0 0.0
        %522 = vmatprep.subr.mxu0 0.0
        %523 = vmatpush2.msra.mxu0 0.0
        %524 = vmatprep.subr.mxu0 0.0
        %525 = vmatpush2.msra.mxu0 0.0
        %526 = vmatprep.mubr.f32.mxu0 0.0
        %527 = vmatmul.mubr.f32.gmra.mxu0 %v456
        %v528 = vpop.f32.mrf.mxu0
        %v529 = vadd.f32 %v454, %v528
        %v530 = vpop.f32.mrf.mxu0
        %v531 = vadd.f32 %v454, %v530
        %532 = vdwg.mxu0
        %v533 = vxor.u32 %v529, 2147483648
        %v534 = vxor.u32 %v531, 2147483648
        %v535 = vmul.f32 %v533, 1.442695
        %v536 = vpow.pop %v535
        %v537 = vmul.f32 %v534, 1.442695
        %v538 = vpow.pop %v537
        %v539 = vadd.f32 %v536, 1.0
        %v540 = vadd.f32 %v538, 1.0
        %v541 = vrcp.pop %v539
        %v542 = vmul.f32 1.0, %v541
        %v543 = vrcp.pop %v540
        %v544 = vmul.f32 1.0, %v543
        %v547 = vrot.slane %v542, 4
        %v548 = vrot.slane %v544, 4
        %551 = vst [vmem:[%s258] sm:$0xf0] %v547
        %552 = vst [vmem:[%s258 + $0x8] sm:$0xf0] %v548
        %s553 = scalar_lea.vmem %s267, 2
        %v554 = vld [vmem:[%s553] ss:$4 sm:$0x3]
        %v556 = vlaneseq
        %v557 = vshrl.u32 %v556, 7
        %v558 = vsub.s32 0, %v557
        %v559 = vrot.slane %v554, %v558
        %v560 = vlaneseq
        %v561 = vshrl.u32 %v560, 7
        %v562 = vsub.s32 1, %v561
        %v563 = vrot.slane %v554, %v562
        %567 = vset.pattern.permute.xlu0 0
        %568 = vperm.xlu0 %567, %v279
        %v569 = vpop.permute.xlu0 %568
        %v571 = vmul.f32 %v559, %v569
        %v572 = vmul.f32 %v563, %v569
        %v573 = vld [vmem:[%s273 + $0x10] sm:$0xf]
        %v574 = vld [vmem:[%s273 + $0x18] sm:$0xf]
        %v575 = vadd.f32 %v571, %v573
        %v576 = vadd.f32 %v572, %v574
        %v577 = vxor.u32 %v575, 2147483648
        %v578 = vxor.u32 %v576, 2147483648
        %v579 = vmul.f32 %v577, 1.442695
        %v580 = vpow.pop %v579
        %v581 = vmul.f32 %v578, 1.442695
        %v582 = vpow.pop %v581
        %v583 = vadd.f32 %v580, 1.0
        %v584 = vadd.f32 %v582, 1.0
        %v585 = vrcp.pop %v583
        %v586 = vmul.f32 1.0, %v585
        %v587 = vrcp.pop %v584
        %v588 = vmul.f32 1.0, %v587
        %590 = vset.pattern.permute.xlu0 0
        %591 = vperm.xlu0 %590, %v281
        %v592 = vpop.permute.xlu0 %591
        %v595 = vsel %vm322, %v277, 0
        %v598 = vsel %vm326, %v586, 0
        %v601 = vsel %vm326, %v588, 0
        %603 = vmatprep.subr.mxu0 0.0
        %604 = vmatpush1.msra.mxu0 0.0
        %605 = vmatprep.subr.mxu0 0.0
        %606 = vmatpush1.msra.mxu0 0.0
        %607 = vmatprep.subr.mxu0 0.0
        %608 = vmatpush1.msra.mxu0 0.0
        %609 = vmatprep.subr.mxu0 0.0
        %610 = vmatpush1.msra.mxu0 0.0
        %611 = vmatprep.subr.mxu0 0.0
        %612 = vmatpush1.msra.mxu0 0.0
        %613 = vmatprep.subr.mxu0 0.0
        %614 = vmatpush1.msra.mxu0 0.0
        %615 = vmatprep.subr.mxu0 0.0
        %616 = vmatpush1.msra.mxu0 0.0
        %617 = vmatprep.subr.mxu0 0.0
        %618 = vmatpush1.msra.mxu0 0.0
        %619 = vmatprep.subr.mxu0 0.0
        %620 = vmatpush1.msra.mxu0 0.0
        %621 = vmatprep.subr.mxu0 0.0
        %622 = vmatpush1.msra.mxu0 0.0
        %623 = vmatprep.subr.mxu0 0.0
        %624 = vmatpush1.msra.mxu0 0.0
        %625 = vmatprep.subr.mxu0 0.0
        %626 = vmatpush1.msra.mxu0 0.0
        %627 = vmatprep.subr.mxu0 0.0
        %628 = vmatpush1.msra.mxu0 0.0
        %629 = vmatprep.subr.mxu0 0.0
        %630 = vmatpush1.msra.mxu0 0.0
        %631 = vmatprep.subr.mxu0 0.0
        %632 = vmatpush1.msra.mxu0 0.0
        %633 = vmatprep.subr.mxu0 %v601
        %634 = vmatpush1.msra.mxu0 %v598
        %635 = vmatprep.subr.mxu0 0.0
        %636 = vmatpush2.msra.mxu0 0.0
        %637 = vmatprep.subr.mxu0 0.0
        %638 = vmatpush2.msra.mxu0 0.0
        %639 = vmatprep.subr.mxu0 0.0
        %640 = vmatpush2.msra.mxu0 0.0
        %641 = vmatprep.subr.mxu0 0.0
        %642 = vmatpush2.msra.mxu0 0.0
        %643 = vmatprep.subr.mxu0 0.0
        %644 = vmatpush2.msra.mxu0 0.0
        %645 = vmatprep.subr.mxu0 0.0
        %646 = vmatpush2.msra.mxu0 0.0
        %647 = vmatprep.subr.mxu0 0.0
        %648 = vmatpush2.msra.mxu0 0.0
        %649 = vmatprep.subr.mxu0 0.0
        %650 = vmatpush2.msra.mxu0 0.0
        %651 = vmatprep.subr.mxu0 0.0
        %652 = vmatpush2.msra.mxu0 0.0
        %653 = vmatprep.subr.mxu0 0.0
        %654 = vmatpush2.msra.mxu0 0.0
        %655 = vmatprep.subr.mxu0 0.0
        %656 = vmatpush2.msra.mxu0 0.0
        %657 = vmatprep.subr.mxu0 0.0
        %658 = vmatpush2.msra.mxu0 0.0
        %659 = vmatprep.subr.mxu0 0.0
        %660 = vmatpush2.msra.mxu0 0.0
        %661 = vmatprep.subr.mxu0 0.0
        %662 = vmatpush2.msra.mxu0 0.0
        %663 = vmatprep.subr.mxu0 0.0
        %664 = vmatpush2.msra.mxu0 0.0
        %665 = vmatprep.subr.mxu0 0.0
        %666 = vmatpush2.msra.mxu0 0.0
        %667 = vmatprep.mubr.f32.mxu0 0.0
        %668 = vmatmul.mubr.f32.gmra.mxu0 %v595
        %v669 = vpop.f32.mrf.mxu0
        %v670 = vadd.f32 %v592, %v669
        %v671 = vpop.f32.mrf.mxu0
        %v672 = vadd.f32 %v592, %v671
        %673 = vdwg.mxu0
        %v674 = vxor.u32 %v670, 2147483648
        %v675 = vxor.u32 %v672, 2147483648
        %v676 = vmul.f32 %v674, 1.442695
        %v677 = vpow.pop %v676
        %v678 = vmul.f32 %v675, 1.442695
        %v679 = vpow.pop %v678
        %v680 = vadd.f32 %v677, 1.0
        %v681 = vadd.f32 %v679, 1.0
        %v682 = vrcp.pop %v680
        %v683 = vmul.f32 1.0, %v682
        %v684 = vrcp.pop %v681
        %v685 = vmul.f32 1.0, %v684
        %686 = vst [vmem:[%s258 + $0x10] sm:$0xf] %v683
        %687 = vst [vmem:[%s258 + $0x18] sm:$0xf] %v685
        %s688 = scalar_lea.vmem %s267, 3
        %v689 = vld [vmem:[%s688] ss:$4 sm:$0x3]
        %v691 = vlaneseq
        %v692 = vshrl.u32 %v691, 7
        %v693 = vsub.s32 0, %v692
        %v694 = vrot.slane %v689, %v693
        %v695 = vlaneseq
        %v696 = vshrl.u32 %v695, 7
        %v697 = vsub.s32 1, %v696
        %v698 = vrot.slane %v689, %v697
        %v701 = vmul.f32 %v694, %v569
        %v702 = vmul.f32 %v698, %v569
        %v703 = vld [vmem:[%s273 + $0x10] sm:$0xf0]
        %v704 = vld [vmem:[%s273 + $0x18] sm:$0xf0]
        %v705 = vadd.f32 %v701, %v703
        %v706 = vadd.f32 %v702, %v704
        %v707 = vxor.u32 %v705, 2147483648
        %v708 = vxor.u32 %v706, 2147483648
        %v709 = vmul.f32 %v707, 1.442695
        %v710 = vpow.pop %v709
        %v711 = vmul.f32 %v708, 1.442695
        %v712 = vpow.pop %v711
        %v713 = vadd.f32 %v710, 1.0
        %v714 = vadd.f32 %v712, 1.0
        %v715 = vrcp.pop %v713
        %v716 = vmul.f32 1.0, %v715
        %v717 = vrcp.pop %v714
        %v718 = vmul.f32 1.0, %v717
        %v719 = vrot.slane %v277, 4
        %v722 = vrot.slane %v716, 4
        %v723 = vrot.slane %v718, 4
        %v724 = vrot.slane %v592, 4
        %v726 = vsel %vm322, %v719, 0
        %v728 = vsel %vm326, %v722, 0
        %v730 = vsel %vm326, %v723, 0
        %732 = vmatprep.subr.mxu0 0.0
        %733 = vmatpush1.msra.mxu0 0.0
        %734 = vmatprep.subr.mxu0 0.0
        %735 = vmatpush1.msra.mxu0 0.0
        %736 = vmatprep.subr.mxu0 0.0
        %737 = vmatpush1.msra.mxu0 0.0
        %738 = vmatprep.subr.mxu0 0.0
        %739 = vmatpush1.msra.mxu0 0.0
        %740 = vmatprep.subr.mxu0 0.0
        %741 = vmatpush1.msra.mxu0 0.0
        %742 = vmatprep.subr.mxu0 0.0
        %743 = vmatpush1.msra.mxu0 0.0
        %744 = vmatprep.subr.mxu0 0.0
        %745 = vmatpush1.msra.mxu0 0.0
        %746 = vmatprep.subr.mxu0 0.0
        %747 = vmatpush1.msra.mxu0 0.0
        %748 = vmatprep.subr.mxu0 0.0
        %749 = vmatpush1.msra.mxu0 0.0
        %750 = vmatprep.subr.mxu0 0.0
        %751 = vmatpush1.msra.mxu0 0.0
        %752 = vmatprep.subr.mxu0 0.0
        %753 = vmatpush1.msra.mxu0 0.0
        %754 = vmatprep.subr.mxu0 0.0
        %755 = vmatpush1.msra.mxu0 0.0
        %756 = vmatprep.subr.mxu0 0.0
        %757 = vmatpush1.msra.mxu0 0.0
        %758 = vmatprep.subr.mxu0 0.0
        %759 = vmatpush1.msra.mxu0 0.0
        %760 = vmatprep.subr.mxu0 0.0
        %761 = vmatpush1.msra.mxu0 0.0
        %762 = vmatprep.subr.mxu0 %v730
        %763 = vmatpush1.msra.mxu0 %v728
        %764 = vmatprep.subr.mxu0 0.0
        %765 = vmatpush2.msra.mxu0 0.0
        %766 = vmatprep.subr.mxu0 0.0
        %767 = vmatpush2.msra.mxu0 0.0
        %768 = vmatprep.subr.mxu0 0.0
        %769 = vmatpush2.msra.mxu0 0.0
        %770 = vmatprep.subr.mxu0 0.0
        %771 = vmatpush2.msra.mxu0 0.0
        %772 = vmatprep.subr.mxu0 0.0
        %773 = vmatpush2.msra.mxu0 0.0
        %774 = vmatprep.subr.mxu0 0.0
        %775 = vmatpush2.msra.mxu0 0.0
        %776 = vmatprep.subr.mxu0 0.0
        %777 = vmatpush2.msra.mxu0 0.0
        %778 = vmatprep.subr.mxu0 0.0
        %779 = vmatpush2.msra.mxu0 0.0
        %780 = vmatprep.subr.mxu0 0.0
        %781 = vmatpush2.msra.mxu0 0.0
        %782 = vmatprep.subr.mxu0 0.0
        %783 = vmatpush2.msra.mxu0 0.0
        %784 = vmatprep.subr.mxu0 0.0
        %785 = vmatpush2.msra.mxu0 0.0
        %786 = vmatprep.subr.mxu0 0.0
        %787 = vmatpush2.msra.mxu0 0.0
        %788 = vmatprep.subr.mxu0 0.0
        %789 = vmatpush2.msra.mxu0 0.0
        %790 = vmatprep.subr.mxu0 0.0
        %791 = vmatpush2.msra.mxu0 0.0
        %792 = vmatprep.subr.mxu0 0.0
        %793 = vmatpush2.msra.mxu0 0.0
        %794 = vmatprep.subr.mxu0 0.0
        %795 = vmatpush2.msra.mxu0 0.0
        %796 = vmatprep.mubr.f32.mxu0 0.0
        %797 = vmatmul.mubr.f32.gmra.mxu0 %v726
        %v798 = vpop.f32.mrf.mxu0
        %v799 = vadd.f32 %v724, %v798
        %v800 = vpop.f32.mrf.mxu0
        %v801 = vadd.f32 %v724, %v800
        %802 = vdwg.mxu0
        %v803 = vxor.u32 %v799, 2147483648
        %v804 = vxor.u32 %v801, 2147483648
        %v805 = vmul.f32 %v803, 1.442695
        %v806 = vpow.pop %v805
        %v807 = vmul.f32 %v804, 1.442695
        %v808 = vpow.pop %v807
        %v809 = vadd.f32 %v806, 1.0
        %v810 = vadd.f32 %v808, 1.0
        %v811 = vrcp.pop %v809
        %v812 = vmul.f32 1.0, %v811
        %v813 = vrcp.pop %v810
        %v814 = vmul.f32 1.0, %v813
        %v817 = vrot.slane %v812, 4
        %v818 = vrot.slane %v814, 4
        %821 = vst [vmem:[%s258 + $0x10] sm:$0xf0] %v817
        %822 = vst [vmem:[%s258 + $0x18] sm:$0xf0] %v818
        %s823 = sand.u32 %s158, 1
        %s824 = scalar_lea.sflag [#allocation3], %s823
        %s825 = sand.u32 %s158, 1
        %s826 = smul.addr %s825, 32
        %s827 = scalar_lea.vmem [#allocation2], %s826
        // Predicated region
        $region41: #{tpu_custom_call.1} parent=39 // pred_check
          %p828 = pneg %p168
        $region42: #{tpu_custom_call.1} parent=39 // pred_check_branch
          %830 = sbr.rel (%p828) target = $region44
        $region43: #{tpu_custom_call.1} parent=39 // pred_region
          %s831 = smul.u32 2, %s23
          %s833 = ssub.s32 512, 512
          %834 = vsyncadd %s824, %s833
          %s835 = smul.addr %s24, 4
          %s836 = sadd.s32 %s831, %s835
          %s837 = smul.addr %s836, 128
          %s838 = scalar_lea.hbm %s5, %s837
          %s839 = sshll.u32 %s827, 4
          %s840 = int_to_ptr.vmem [resolvable:$true] %s839
          %845 = dma.vmem_to_hbm [thread:$0]  %s840, 512, %s838, %s824, 256, 256, 16
        $region44: #{tpu_custom_call.1} parent=39 // pred_fallthru
          _
      $region40: #{tpu_custom_call.1} parent=5 // pred_fallthru
        _
      %p846 = scmp.le.s32.totalorder 2, %s14
      // Predicated region
      $region45: #{tpu_custom_call.1} parent=5 // pred_check
        %p847 = pneg %p846
      $region46: #{tpu_custom_call.1} parent=5 // pred_check_branch
        %849 = sbr.rel (%p847) target = $region48
      $region47: #{tpu_custom_call.1} parent=5 // pred_region
        %s850 = ssub.s32 %s14, 2
        // Predicated region
        $region49: #{tpu_custom_call.1} parent=47 // pred_check
          %p851 = pneg %p174
        $region50: #{tpu_custom_call.1} parent=47 // pred_check_branch
          %853 = sbr.rel (%p851) target = $region52
        $region51: #{tpu_custom_call.1} parent=47 // pred_region
          %s854 = sand.u32 %s159, 1
          %s855 = scalar_lea.sflag [#allocation3], %s854
          %s856 = sand.u32 %s159, 1
          %s857 = smul.addr %s856, 32
          %s858 = scalar_lea.vmem [#allocation2], %s857
          %859 = dma.done %s855, 512
        $region52: #{tpu_custom_call.1} parent=47 // pred_fallthru
          _
      $region48: #{tpu_custom_call.1} parent=5 // pred_fallthru
        _
    $region6: #{tpu_custom_call.1} parent=1 // loop_footer
      %s18 = sadd.s32 1, %s14
    $region7: #{tpu_custom_call.1} parent=1 // loop_footer_branch
      %13 = sbr.rel target = $region3
    $region8: #{tpu_custom_call.1} parent=1 // loop_exit
      _
    %860 = vsyncpa [#allocation3], 1
    %s861 = scalar_lea.sflag [#allocation3], 1
    %862 = vsyncpa %s861, 1

// kernel: tpu_custom_call.1
$region0: #{tpu_custom_call.1}
  #allocation0 [shape = 'u32[]', space=smem, size = 0x4, offset = 0x4, fixed_abs, tag = 'smem constant byte address 0x4 - core index']
  #allocation1 [shape = 'u32[144,128]{1,0:T(1,128)}', space=vmem, size = 0x12000, scoped, tag = 'internal scratch']
  %s0 = inlined_call_operand.vmem [shape: f32[2,4,256], index: 0, kind: input, shape index: {}]
  %s1 = inlined_call_operand.vmem [shape: f32[16,256], index: 1, kind: input, shape index: {}]
  %s2 = inlined_call_operand.vmem [shape: f32[16,1], index: 2, kind: input, shape index: {}]
  %s3 = inlined_call_operand.vmem [shape: f32[16,4], index: 3, kind: input, shape index: {}]
  %s4 = inlined_call_operand.vmem [shape: f32[16,1], index: 4, kind: input, shape index: {}]
  %s5 = inlined_call_operand.hbm [shape: f32[2,16,256], index: 5, kind: output, shape index: {}]
  %s6 = sld [smem:[#allocation0]]
  $region53: #{tpu_custom_call.1} parent=0
    _
  %s8 = ssub.s32 1, %s6
  %s9 = scalar_select 0, %s8, %s6
  $region1: #{tpu_custom_call.1} parent=0
    #allocation2 [shape = 'u8[32768]{0}', space=vmem, size = 0x8000, scoped, tag = 'output window, operand 0']
    #allocation3 [shape = 's32[2]{0}', space=sflag, size = 0x8, scoped, tag = 'scoped memory for tpu_custom_call.1']
    %10 = vsyncpa [#allocation3], 0
    %s11 = scalar_lea.sflag [#allocation3], 1
    %12 = vsyncpa %s11, 0
    loop: start=0, step=1, limit=4
    $region2: #{tpu_custom_call.1} parent=1 // loop_pre_header
      _
    $region3: #{tpu_custom_call.1} parent=1 // loop_header
      %s14 = sphi 0, %s18
      %p15 = scmp.ge.s32.totalorder %s14, 4
      %s21 = sphi 0, %s33
      %s22 = sphi 0, %s29
      %s23 = sphi 0, %s21
      %s24 = sphi 0, %s22
      %s25 = sphi 0, %s23
      %s26 = sphi 0, %s24
      %s38 = sphi 0, %s40
      %s41 = sphi 0, %s38
      %s42 = sphi 0, %s41
      %s58 = sphi 0, %s42
      %s64 = sphi 0, %s66
      %s67 = sphi 0, %s64
      %s68 = sphi 0, %s67
      %s84 = sphi 0, %s68
      %s88 = sphi 0, %s88
      %s90 = sphi 0, %s88
      %s91 = sphi 0, %s90
      %s105 = sphi 0, %s91
      %s109 = sphi 0, %s109
      %s111 = sphi 0, %s109
      %s112 = sphi 0, %s111
      %s126 = sphi 0, %s112
      %s130 = sphi 0, %s130
      %s132 = sphi 0, %s130
      %s133 = sphi 0, %s132
      %s147 = sphi 0, %s133
      %s155 = sphi 0, %s157
      %s158 = sphi 0, %s155
      %s159 = sphi 0, %s158
      %s175 = sphi 0, %s159
    $region4: #{tpu_custom_call.1} parent=1 // loop_header_branch
      %17 = sbr.rel (%p15) target = $region8
    $region5: #{tpu_custom_call.1} parent=1 // loop_body
      %s19 = ssub.s32 %s14, 1
      %s20 = ssub.s32 %s14, 2
      %s27 = sadd.s32 1, %s22
      %p28 = scmp.ge.s32.totalorder %s27, 2
      %s29 = scalar_select %p28, 0, %s27
      %s30 = sadd.s32 1, %s21
      %s31 = scalar_select %p28, %s30, %s21
      %p32 = scmp.ge.s32.totalorder %s31, 1
      %s33 = scalar_select %p32, 0, %s31
      %s34 = ssub.s32 %s22, %s29
      %s35 = ssub.s32 %s21, %s33
      %s36 = sor.u32 %s34, %s35
      %p37 = scmp.eq.s32.totalorder %s36, 0
      %s39 = sadd.s32 %s38, 1
      %s40 = scalar_select %p37, %s38, %s39
      %p43 = pneg %p37
      %p44 = scmp.eq.s32.totalorder %s14, 1
      %p45 = por %p43, %p44
      %p46 = scmp.ne.s32.totalorder %s38, %s41
      %p47 = scmp.eq.s32.totalorder %s14, 0
      %p48 = por %p46, %p47
      %p49 = scmp.ne.s32.totalorder %s38, %s41
      %p50 = scmp.eq.s32.totalorder %s19, 1
      %p51 = por %p49, %p50
      %p52 = scmp.ne.s32.totalorder %s41, %s42
      %p53 = scmp.eq.s32.totalorder %s19, 0
      %p54 = por %p52, %p53
      %p55 = scmp.ne.s32.totalorder %s41, %s42
      %p56 = scmp.eq.s32.totalorder %s20, 1
      %p57 = por %p55, %p56
      %p59 = scmp.ne.s32.totalorder %s42, %s58
      %p60 = scmp.eq.s32.totalorder %s20, 0
      %p61 = por %p59, %p60
      %s62 = ssub.s32 %s21, %s33
      %p63 = scmp.eq.s32.totalorder %s62, 0
      %s65 = sadd.s32 %s64, 1
      %s66 = scalar_select %p63, %s64, %s65
      %p69 = pneg %p63
      %p70 = scmp.eq.s32.totalorder %s14, 1
      %p71 = por %p69, %p70
      %p72 = scmp.ne.s32.totalorder %s64, %s67
      %p73 = scmp.eq.s32.totalorder %s14, 0
      %p74 = por %p72, %p73
      %p75 = scmp.ne.s32.totalorder %s64, %s67
      %p76 = scmp.eq.s32.totalorder %s19, 1
      %p77 = por %p75, %p76
      %p78 = scmp.ne.s32.totalorder %s67, %s68
      %p79 = scmp.eq.s32.totalorder %s19, 0
      %p80 = por %p78, %p79
      %p81 = scmp.ne.s32.totalorder %s67, %s68
      %p82 = scmp.eq.s32.totalorder %s20, 1
      %p83 = por %p81, %p82
      %p85 = scmp.ne.s32.totalorder %s68, %s84
      %p86 = scmp.eq.s32.totalorder %s20, 0
      %p87 = por %p85, %p86
      %s89 = sadd.s32 %s88, 1
      %p92 = scmp.eq.s32.totalorder %s14, 1
      %p93 = scmp.ne.s32.totalorder %s88, %s90
      %p94 = scmp.eq.s32.totalorder %s14, 0
      %p95 = por %p93, %p94
      %p96 = scmp.ne.s32.totalorder %s88, %s90
      %p97 = scmp.eq.s32.totalorder %s19, 1
      %p98 = por %p96, %p97
      %p99 = scmp.ne.s32.totalorder %s90, %s91
      %p100 = scmp.eq.s32.totalorder %s19, 0
      %p101 = por %p99, %p100
      %p102 = scmp.ne.s32.totalorder %s90, %s91
      %p103 = scmp.eq.s32.totalorder %s20, 1
      %p104 = por %p102, %p103
      %p106 = scmp.ne.s32.totalorder %s91, %s105
      %p107 = scmp.eq.s32.totalorder %s20, 0
      %p108 = por %p106, %p107
      %s110 = sadd.s32 %s109, 1
      %p113 = scmp.eq.s32.totalorder %s14, 1
      %p114 = scmp.ne.s32.totalorder %s109, %s111
      %p115 = scmp.eq.s32.totalorder %s14, 0
      %p116 = por %p114, %p115
      %p117 = scmp.ne.s32.totalorder %s109, %s111
      %p118 = scmp.eq.s32.totalorder %s19, 1
      %p119 = por %p117, %p118
      %p120 = scmp.ne.s32.totalorder %s111, %s112
      %p121 = scmp.eq.s32.totalorder %s19, 0
      %p122 = por %p120, %p121
      %p123 = scmp.ne.s32.totalorder %s111, %s112
      %p124 = scmp.eq.s32.totalorder %s20, 1
      %p125 = por %p123, %p124
      %p127 = scmp.ne.s32.totalorder %s112, %s126
      %p128 = scmp.eq.s32.totalorder %s20, 0
      %p129 = por %p127, %p128
      %s131 = sadd.s32 %s130, 1
      %p134 = scmp.eq.s32.totalorder %s14, 1
      %p135 = scmp.ne.s32.totalorder %s130, %s132
      %p136 = scmp.eq.s32.totalorder %s14, 0
      %p137 = por %p135, %p136
      %p138 = scmp.ne.s32.totalorder %s130, %s132
      %p139 = scmp.eq.s32.totalorder %s19, 1
      %p140 = por %p138, %p139
      %p141 = scmp.ne.s32.totalorder %s132, %s133
      %p142 = scmp.eq.s32.totalorder %s19, 0
      %p143 = por %p141, %p142
      %p144 = scmp.ne.s32.totalorder %s132, %s133
      %p145 = scmp.eq.s32.totalorder %s20, 1
      %p146 = por %p144, %p145
      %p148 = scmp.ne.s32.totalorder %s133, %s147
      %p149 = scmp.eq.s32.totalorder %s20, 0
      %p150 = por %p148, %p149
      %s151 = ssub.s32 %s22, %s29
      %s152 = ssub.s32 %s21, %s33
      %s153 = sor.u32 %s151, %s152
      %p154 = scmp.eq.s32.totalorder %s153, 0
      %s156 = sadd.s32 %s155, 1
      %s157 = scalar_select %p154, %s155, %s156
      %p160 = pneg %p154
      %p161 = scmp.eq.s32.totalorder %s14, 1
      %p162 = por %p160, %p161
      %p163 = scmp.ne.s32.totalorder %s155, %s158
      %p164 = scmp.eq.s32.totalorder %s14, 0
      %p165 = por %p163, %p164
      %p166 = scmp.ne.s32.totalorder %s155, %s158
      %p167 = scmp.eq.s32.totalorder %s19, 1
      %p168 = por %p166, %p167
      %p169 = scmp.ne.s32.totalorder %s158, %s159
      %p170 = scmp.eq.s32.totalorder %s19, 0
      %p171 = por %p169, %p170
      %p172 = scmp.ne.s32.totalorder %s158, %s159
      %p173 = scmp.eq.s32.totalorder %s20, 1
      %p174 = por %p172, %p173
      %p176 = scmp.ne.s32.totalorder %s159, %s175
      %p177 = scmp.eq.s32.totalorder %s20, 0
      %p178 = por %p176, %p177
      %p179 = scmp.le.s32.totalorder 1, %s14
      %p180 = scmp.lt.s32.totalorder %s14, 3
      %p181 = pnand %p179, %p180
      %p182 = pneg %p181
      // Predicated region
      $region9: #{tpu_custom_call.1} parent=5 // pred_check
        _
      $region10: #{tpu_custom_call.1} parent=5 // pred_check_branch
        %184 = sbr.rel (%p181) target = $region12
      $region11: #{tpu_custom_call.1} parent=5 // pred_region
        %s185 = ssub.s32 %s14, 1
        // Predicated region
        $region13: #{tpu_custom_call.1} parent=11 // pred_check
          %p186 = pneg %p80
        $region14: #{tpu_custom_call.1} parent=11 // pred_check_branch
          %188 = sbr.rel (%p186) target = $region16
        $region15: #{tpu_custom_call.1} parent=11 // pred_region
          %s189 = smul.u32 2, %s23
          %p190 = scmp.lt.s32.totalorder %s189, 1
          %s191 = scalar_select %p190, %s189, 1
          %s192 = smul.addr %s191, 8
          %s193 = scalar_lea.vmem %s1, %s192
          %s194 = smul.u32 2, %s23
        $region16: #{tpu_custom_call.1} parent=11 // pred_fallthru
          _
        // Predicated region
        $region17: #{tpu_custom_call.1} parent=11 // pred_check
          %p195 = pneg %p101
        $region18: #{tpu_custom_call.1} parent=11 // pred_check_branch
          %197 = sbr.rel (%p195) target = $region20
        $region19: #{tpu_custom_call.1} parent=11 // pred_region
          _
        $region20: #{tpu_custom_call.1} parent=11 // pred_fallthru
          _
        // Predicated region
        $region21: #{tpu_custom_call.1} parent=11 // pred_check
          %p198 = pneg %p122
        $region22: #{tpu_custom_call.1} parent=11 // pred_check_branch
          %200 = sbr.rel (%p198) target = $region24
        $region23: #{tpu_custom_call.1} parent=11 // pred_region
          _
        $region24: #{tpu_custom_call.1} parent=11 // pred_fallthru
          _
        // Predicated region
        $region25: #{tpu_custom_call.1} parent=11 // pred_check
          %p201 = pneg %p143
        $region26: #{tpu_custom_call.1} parent=11 // pred_check_branch
          %203 = sbr.rel (%p201) target = $region28
        $region27: #{tpu_custom_call.1} parent=11 // pred_region
          _
        $region28: #{tpu_custom_call.1} parent=11 // pred_fallthru
          _
      $region12: #{tpu_custom_call.1} parent=5 // pred_fallthru
        _
      %p204 = scmp.lt.s32.totalorder %s14, 2
      // Predicated region
      $region29: #{tpu_custom_call.1} parent=5 // pred_check
        %p205 = pneg %p204
      $region30: #{tpu_custom_call.1} parent=5 // pred_check_branch
        %207 = sbr.rel (%p205) target = $region32
      $region31: #{tpu_custom_call.1} parent=5 // pred_region
        // Predicated region
        $region33: #{tpu_custom_call.1} parent=31 // pred_check
          %p208 = pneg %p48
        $region34: #{tpu_custom_call.1} parent=31 // pred_check_branch
          %210 = sbr.rel (%p208) target = $region36
        $region35: #{tpu_custom_call.1} parent=31 // pred_region
          %s211 = smul.u32 2, %s21
          %p212 = scmp.lt.s32.totalorder %s22, 1
          %s213 = scalar_select %p212, %s22, 1
          %p214 = scmp.lt.s32.totalorder %s211, 1
          %s215 = scalar_select %p214, %s211, 1
          %s216 = smul.addr %s213, 2
          %s217 = sadd.s32 %s215, %s216
          %s218 = smul.addr %s217, 4
          %s219 = scalar_lea.vmem %s0, %s218
          %s220 = smul.u32 2, %s21
        $region36: #{tpu_custom_call.1} parent=31 // pred_fallthru
          _
      $region32: #{tpu_custom_call.1} parent=5 // pred_fallthru
        _
      %p221 = scmp.le.s32.totalorder 1, %s14
      %p222 = scmp.lt.s32.totalorder %s14, 3
      %p223 = pnand %p221, %p222
      %p224 = pneg %p223
      // Predicated region
      $region37: #{tpu_custom_call.1} parent=5 // pred_check
        _
      $region38: #{tpu_custom_call.1} parent=5 // pred_check_branch
        %226 = sbr.rel (%p223) target = $region40
      $region39: #{tpu_custom_call.1} parent=5 // pred_region
        %s227 = ssub.s32 %s14, 1
        %s228 = smul.u32 2, %s23
        %p229 = scmp.lt.s32.totalorder %s24, 1
        %s230 = scalar_select %p229, %s24, 1
        %p231 = scmp.lt.s32.totalorder %s228, 1
        %s232 = scalar_select %p231, %s228, 1
        %s233 = smul.addr %s230, 2
        %s234 = sadd.s32 %s232, %s233
        %s235 = smul.addr %s234, 4
        %s236 = scalar_lea.vmem %s0, %s235
        %p237 = pneg %p54
        %p238 = pneg %p51
        %s239 = smul.u32 2, %s23
        %p240 = scmp.lt.s32.totalorder %s239, 1
        %s241 = scalar_select %p240, %s239, 1
        %s242 = smul.addr %s241, 8
        %s243 = scalar_lea.vmem %s1, %s242
        %p244 = pneg %p80
        %p245 = pneg %p77
        %p246 = pneg %p101
        %p247 = pneg %p98
        %p248 = pneg %p122
        %p249 = pneg %p119
        %p250 = pneg %p143
        %p251 = pneg %p140
        %p252 = pneg %p171
        %p253 = pneg %p168
        %s254 = sand.u32 %s158, 1
        %s255 = scalar_lea.sflag [#allocation3], %s254
        %s256 = sand.u32 %s158, 1
        %s257 = smul.addr %s256, 32
        %s258 = scalar_lea.vmem [#allocation2], %s257
        %s259 = smul.u32 2, %s23
        %p260 = scmp.lt.s32.totalorder %s24, 1
        %s261 = scalar_select %p260, %s24, 1
        %p262 = scmp.lt.s32.totalorder %s259, 1
        %s263 = scalar_select %p262, %s259, 1
        %s264 = smul.addr %s261, 2
        %s265 = sadd.s32 %s263, %s264
        %s266 = smul.addr %s265, 4
        %s267 = scalar_lea.vmem %s0, %s266
        %s268 = smul.u32 2, %s23
        %s269 = smul.u32 2, %s23
        %p270 = scmp.lt.s32.totalorder %s269, 1
        %s271 = scalar_select %p270, %s269, 1
        %s272 = smul.addr %s271, 8
        %s273 = scalar_lea.vmem %s1, %s272
        %s274 = smul.u32 2, %s23
        %s275 = smul.u32 2, %s23
        %v276 = vld [vmem:[%s3] sm:$0xff]
        %v277 = vld [vmem:[%s3 + $0x8] sm:$0xff]
        %v278 = vld [vmem:[%s2] sm:$0xff]
        %v279 = vld [vmem:[%s2 + $0x8] sm:$0xff]
        %v280 = vld [vmem:[%s4] sm:$0xff]
        %v281 = vld [vmem:[%s4 + $0x8] sm:$0xff]
        %v282 = vld [vmem:[%s267] ss:$4 sm:$0x3]
        %v284 = vlaneseq
        %v285 = vshrl.u32 %v284, 7
        %v286 = vsub.s32 0, %v285
        %v287 = vrot.slane %v282, %v286
        %v288 = vlaneseq
        %v289 = vshrl.u32 %v288, 7
        %v290 = vsub.s32 1, %v289
        %v291 = vrot.slane %v282, %v290
        %295 = vset.pattern.permute.xlu0 0
        %296 = vperm.xlu0 %295, %v278
        %v297 = vpop.permute.xlu0 %296
        %v299 = vmul.f32 %v287, %v297
        %v300 = vmul.f32 %v291, %v297
        %v301 = vld [vmem:[%s273] sm:$0xf]
        %v302 = vld [vmem:[%s273 + $0x8] sm:$0xf]
        %v303 = vadd.f32 %v299, %v301
        %v304 = vadd.f32 %v300, %v302
        %v305 = vxor.u32 %v303, 2147483648
        %v306 = vxor.u32 %v304, 2147483648
        %v307 = vmul.f32 %v305, 1.442695
        %v308 = vpow.pop %v307
        %v309 = vmul.f32 %v306, 1.442695
        %v310 = vpow.pop %v309
        %v311 = vadd.f32 %v308, 1.0
        %v312 = vadd.f32 %v310, 1.0
        %v313 = vrcp.pop %v311
        %v314 = vmul.f32 1.0, %v313
        %v315 = vrcp.pop %v312
        %v316 = vmul.f32 1.0, %v315
        %318 = vset.pattern.permute.xlu0 0
        %319 = vperm.xlu0 %318, %v280
        %v320 = vpop.permute.xlu0 %319
        %vm322 = vcmask 31744
        %v324 = vsel %vm322, %v276, 0
        %vm326 = vcmask 1043456
        %v328 = vsel %vm326, %v314, 0
        %v331 = vsel %vm326, %v316, 0
        %333 = vmatprep.subr.mxu0 0.0
        %334 = vmatpush1.msra.mxu0 0.0
        %335 = vmatprep.subr.mxu0 0.0
        %336 = vmatpush1.msra.mxu0 0.0
        %337 = vmatprep.subr.mxu0 0.0
        %338 = vmatpush1.msra.mxu0 0.0
        %339 = vmatprep.subr.mxu0 0.0
        %340 = vmatpush1.msra.mxu0 0.0
        %341 = vmatprep.subr.mxu0 0.0
        %342 = vmatpush1.msra.mxu0 0.0
        %343 = vmatprep.subr.mxu0 0.0
        %344 = vmatpush1.msra.mxu0 0.0
        %345 = vmatprep.subr.mxu0 0.0
        %346 = vmatpush1.msra.mxu0 0.0
        %347 = vmatprep.subr.mxu0 0.0
        %348 = vmatpush1.msra.mxu0 0.0
        %349 = vmatprep.subr.mxu0 0.0
        %350 = vmatpush1.msra.mxu0 0.0
        %351 = vmatprep.subr.mxu0 0.0
        %352 = vmatpush1.msra.mxu0 0.0
        %353 = vmatprep.subr.mxu0 0.0
        %354 = vmatpush1.msra.mxu0 0.0
        %355 = vmatprep.subr.mxu0 0.0
        %356 = vmatpush1.msra.mxu0 0.0
        %357 = vmatprep.subr.mxu0 0.0
        %358 = vmatpush1.msra.mxu0 0.0
        %359 = vmatprep.subr.mxu0 0.0
        %360 = vmatpush1.msra.mxu0 0.0
        %361 = vmatprep.subr.mxu0 0.0
        %362 = vmatpush1.msra.mxu0 0.0
        %363 = vmatprep.subr.mxu0 %v331
        %364 = vmatpush1.msra.mxu0 %v328
        %365 = vmatprep.subr.mxu0 0.0
        %366 = vmatpush2.msra.mxu0 0.0
        %367 = vmatprep.subr.mxu0 0.0
        %368 = vmatpush2.msra.mxu0 0.0
        %369 = vmatprep.subr.mxu0 0.0
        %370 = vmatpush2.msra.mxu0 0.0
        %371 = vmatprep.subr.mxu0 0.0
        %372 = vmatpush2.msra.mxu0 0.0
        %373 = vmatprep.subr.mxu0 0.0
        %374 = vmatpush2.msra.mxu0 0.0
        %375 = vmatprep.subr.mxu0 0.0
        %376 = vmatpush2.msra.mxu0 0.0
        %377 = vmatprep.subr.mxu0 0.0
        %378 = vmatpush2.msra.mxu0 0.0
        %379 = vmatprep.subr.mxu0 0.0
        %380 = vmatpush2.msra.mxu0 0.0
        %381 = vmatprep.subr.mxu0 0.0
        %382 = vmatpush2.msra.mxu0 0.0
        %383 = vmatprep.subr.mxu0 0.0
        %384 = vmatpush2.msra.mxu0 0.0
        %385 = vmatprep.subr.mxu0 0.0
        %386 = vmatpush2.msra.mxu0 0.0
        %387 = vmatprep.subr.mxu0 0.0
        %388 = vmatpush2.msra.mxu0 0.0
        %389 = vmatprep.subr.mxu0 0.0
        %390 = vmatpush2.msra.mxu0 0.0
        %391 = vmatprep.subr.mxu0 0.0
        %392 = vmatpush2.msra.mxu0 0.0
        %393 = vmatprep.subr.mxu0 0.0
        %394 = vmatpush2.msra.mxu0 0.0
        %395 = vmatprep.subr.mxu0 0.0
        %396 = vmatpush2.msra.mxu0 0.0
        %397 = vmatprep.mubr.f32.mxu0 0.0
        %398 = vmatmul.mubr.f32.gmra.mxu0 %v324
        %v399 = vpop.f32.mrf.mxu0
        %v400 = vadd.f32 %v320, %v399
        %v401 = vpop.f32.mrf.mxu0
        %v402 = vadd.f32 %v320, %v401
        %403 = vdwg.mxu0
        %v404 = vxor.u32 %v400, 2147483648
        %v405 = vxor.u32 %v402, 2147483648
        %v406 = vmul.f32 %v404, 1.442695
        %v407 = vpow.pop %v406
        %v408 = vmul.f32 %v405, 1.442695
        %v409 = vpow.pop %v408
        %v410 = vadd.f32 %v407, 1.0
        %v411 = vadd.f32 %v409, 1.0
        %v412 = vrcp.pop %v410
        %v413 = vmul.f32 1.0, %v412
        %v414 = vrcp.pop %v411
        %v415 = vmul.f32 1.0, %v414
        %416 = vst [vmem:[%s258] sm:$0xf] %v413
        %417 = vst [vmem:[%s258 + $0x8] sm:$0xf] %v415
        %s418 = scalar_lea.vmem %s267, 1
        %v419 = vld [vmem:[%s418] ss:$4 sm:$0x3]
        %v421 = vlaneseq
        %v422 = vshrl.u32 %v421, 7
        %v423 = vsub.s32 0, %v422
        %v424 = vrot.slane %v419, %v423
        %v425 = vlaneseq
        %v426 = vshrl.u32 %v425, 7
        %v427 = vsub.s32 1, %v426
        %v428 = vrot.slane %v419, %v427
        %v431 = vmul.f32 %v424, %v297
        %v432 = vmul.f32 %v428, %v297
        %v433 = vld [vmem:[%s273] sm:$0xf0]
        %v434 = vld [vmem:[%s273 + $0x8] sm:$0xf0]
        %v435 = vadd.f32 %v431, %v433
        %v436 = vadd.f32 %v432, %v434
        %v437 = vxor.u32 %v435, 2147483648
        %v438 = vxor.u32 %v436, 2147483648
        %v439 = vmul.f32 %v437, 1.442695
        %v440 = vpow.pop %v439
        %v441 = vmul.f32 %v438, 1.442695
        %v442 = vpow.pop %v441
        %v443 = vadd.f32 %v440, 1.0
        %v444 = vadd.f32 %v442, 1.0
        %v445 = vrcp.pop %v443
        %v446 = vmul.f32 1.0, %v445
        %v447 = vrcp.pop %v444
        %v448 = vmul.f32 1.0, %v447
        %v449 = vrot.slane %v276, 4
        %v452 = vrot.slane %v446, 4
        %v453 = vrot.slane %v448, 4
        %v454 = vrot.slane %v320, 4
        %v456 = vsel %vm322, %v449, 0
        %v458 = vsel %vm326, %v452, 0
        %v460 = vsel %vm326, %v453, 0
        %462 = vmatprep.subr.mxu0 0.0
        %463 = vmatpush1.msra.mxu0 0.0
        %464 = vmatprep.subr.mxu0 0.0
        %465 = vmatpush1.msra.mxu0 0.0
        %466 = vmatprep.subr.mxu0 0.0
        %467 = vmatpush1.msra.mxu0 0.0
        %468 = vmatprep.subr.mxu0 0.0
        %469 = vmatpush1.msra.mxu0 0.0
        %470 = vmatprep.subr.mxu0 0.0
        %471 = vmatpush1.msra.mxu0 0.0
        %472 = vmatprep.subr.mxu0 0.0
        %473 = vmatpush1.msra.mxu0 0.0
        %474 = vmatprep.subr.mxu0 0.0
        %475 = vmatpush1.msra.mxu0 0.0
        %476 = vmatprep.subr.mxu0 0.0
        %477 = vmatpush1.msra.mxu0 0.0
        %478 = vmatprep.subr.mxu0 0.0
        %479 = vmatpush1.msra.mxu0 0.0
        %480 = vmatprep.subr.mxu0 0.0
        %481 = vmatpush1.msra.mxu0 0.0
        %482 = vmatprep.subr.mxu0 0.0
        %483 = vmatpush1.msra.mxu0 0.0
        %484 = vmatprep.subr.mxu0 0.0
        %485 = vmatpush1.msra.mxu0 0.0
        %486 = vmatprep.subr.mxu0 0.0
        %487 = vmatpush1.msra.mxu0 0.0
        %488 = vmatprep.subr.mxu0 0.0
        %489 = vmatpush1.msra.mxu0 0.0
        %490 = vmatprep.subr.mxu0 0.0
        %491 = vmatpush1.msra.mxu0 0.0
        %492 = vmatprep.subr.mxu0 %v460
        %493 = vmatpush1.msra.mxu0 %v458
        %494 = vmatprep.subr.mxu0 0.0
        %495 = vmatpush2.msra.mxu0 0.0
        %496 = vmatprep.subr.mxu0 0.0
        %497 = vmatpush2.msra.mxu0 0.0
        %498 = vmatprep.subr.mxu0 0.0
        %499 = vmatpush2.msra.mxu0 0.0
        %500 = vmatprep.subr.mxu0 0.0
        %501 = vmatpush2.msra.mxu0 0.0
        %502 = vmatprep.subr.mxu0 0.0
        %503 = vmatpush2.msra.mxu0 0.0
        %504 = vmatprep.subr.mxu0 0.0
        %505 = vmatpush2.msra.mxu0 0.0
        %506 = vmatprep.subr.mxu0 0.0
        %507 = vmatpush2.msra.mxu0 0.0
        %508 = vmatprep.subr.mxu0 0.0
        %509 = vmatpush2.msra.mxu0 0.0
        %510 = vmatprep.subr.mxu0 0.0
        %511 = vmatpush2.msra.mxu0 0.0
        %512 = vmatprep.subr.mxu0 0.0
        %513 = vmatpush2.msra.mxu0 0.0
        %514 = vmatprep.subr.mxu0 0.0
        %515 = vmatpush2.msra.mxu0 0.0
        %516 = vmatprep.subr.mxu0 0.0
        %517 = vmatpush2.msra.mxu0 0.0
        %518 = vmatprep.subr.mxu0 0.0
        %519 = vmatpush2.msra.mxu0 0.0
        %520 = vmatprep.subr.mxu0 0.0
        %521 = vmatpush2.msra.mxu0 0.0
        %522 = vmatprep.subr.mxu0 0.0
        %523 = vmatpush2.msra.mxu0 0.0
        %524 = vmatprep.subr.mxu0 0.0
        %525 = vmatpush2.msra.mxu0 0.0
        %526 = vmatprep.mubr.f32.mxu0 0.0
        %527 = vmatmul.mubr.f32.gmra.mxu0 %v456
        %v528 = vpop.f32.mrf.mxu0
        %v529 = vadd.f32 %v454, %v528
        %v530 = vpop.f32.mrf.mxu0
        %v531 = vadd.f32 %v454, %v530
        %532 = vdwg.mxu0
        %v533 = vxor.u32 %v529, 2147483648
        %v534 = vxor.u32 %v531, 2147483648
        %v535 = vmul.f32 %v533, 1.442695
        %v536 = vpow.pop %v535
        %v537 = vmul.f32 %v534, 1.442695
        %v538 = vpow.pop %v537
        %v539 = vadd.f32 %v536, 1.0
        %v540 = vadd.f32 %v538, 1.0
        %v541 = vrcp.pop %v539
        %v542 = vmul.f32 1.0, %v541
        %v543 = vrcp.pop %v540
        %v544 = vmul.f32 1.0, %v543
        %v547 = vrot.slane %v542, 4
        %v548 = vrot.slane %v544, 4
        %551 = vst [vmem:[%s258] sm:$0xf0] %v547
        %552 = vst [vmem:[%s258 + $0x8] sm:$0xf0] %v548
        %s553 = scalar_lea.vmem %s267, 2
        %v554 = vld [vmem:[%s553] ss:$4 sm:$0x3]
        %v556 = vlaneseq
        %v557 = vshrl.u32 %v556, 7
        %v558 = vsub.s32 0, %v557
        %v559 = vrot.slane %v554, %v558
        %v560 = vlaneseq
        %v561 = vshrl.u32 %v560, 7
        %v562 = vsub.s32 1, %v561
        %v563 = vrot.slane %v554, %v562
        %567 = vset.pattern.permute.xlu0 0
        %568 = vperm.xlu0 %567, %v279
        %v569 = vpop.permute.xlu0 %568
        %v571 = vmul.f32 %v559, %v569
        %v572 = vmul.f32 %v563, %v569
        %v573 = vld [vmem:[%s273 + $0x10] sm:$0xf]
        %v574 = vld [vmem:[%s273 + $0x18] sm:$0xf]
        %v575 = vadd.f32 %v571, %v573
        %v576 = vadd.f32 %v572, %v574
        %v577 = vxor.u32 %v575, 2147483648
        %v578 = vxor.u32 %v576, 2147483648
        %v579 = vmul.f32 %v577, 1.442695
        %v580 = vpow.pop %v579
        %v581 = vmul.f32 %v578, 1.442695
        %v582 = vpow.pop %v581
        %v583 = vadd.f32 %v580, 1.0
        %v584 = vadd.f32 %v582, 1.0
        %v585 = vrcp.pop %v583
        %v586 = vmul.f32 1.0, %v585
        %v587 = vrcp.pop %v584
        %v588 = vmul.f32 1.0, %v587
        %590 = vset.pattern.permute.xlu0 0
        %591 = vperm.xlu0 %590, %v281
        %v592 = vpop.permute.xlu0 %591
        %v595 = vsel %vm322, %v277, 0
        %v598 = vsel %vm326, %v586, 0
        %v601 = vsel %vm326, %v588, 0
        %603 = vmatprep.subr.mxu0 0.0
        %604 = vmatpush1.msra.mxu0 0.0
        %605 = vmatprep.subr.mxu0 0.0
        %606 = vmatpush1.msra.mxu0 0.0
        %607 = vmatprep.subr.mxu0 0.0
        %608 = vmatpush1.msra.mxu0 0.0
        %609 = vmatprep.subr.mxu0 0.0
        %610 = vmatpush1.msra.mxu0 0.0
        %611 = vmatprep.subr.mxu0 0.0
        %612 = vmatpush1.msra.mxu0 0.0
        %613 = vmatprep.subr.mxu0 0.0
        %614 = vmatpush1.msra.mxu0 0.0
        %615 = vmatprep.subr.mxu0 0.0
        %616 = vmatpush1.msra.mxu0 0.0
        %617 = vmatprep.subr.mxu0 0.0
        %618 = vmatpush1.msra.mxu0 0.0
        %619 = vmatprep.subr.mxu0 0.0
        %620 = vmatpush1.msra.mxu0 0.0
        %621 = vmatprep.subr.mxu0 0.0
        %622 = vmatpush1.msra.mxu0 0.0
        %623 = vmatprep.subr.mxu0 0.0
        %624 = vmatpush1.msra.mxu0 0.0
        %625 = vmatprep.subr.mxu0 0.0
        %626 = vmatpush1.msra.mxu0 0.0
        %627 = vmatprep.subr.mxu0 0.0
        %628 = vmatpush1.msra.mxu0 0.0
        %629 = vmatprep.subr.mxu0 0.0
        %630 = vmatpush1.msra.mxu0 0.0
        %631 = vmatprep.subr.mxu0 0.0
        %632 = vmatpush1.msra.mxu0 0.0
        %633 = vmatprep.subr.mxu0 %v601
        %634 = vmatpush1.msra.mxu0 %v598
        %635 = vmatprep.subr.mxu0 0.0
        %636 = vmatpush2.msra.mxu0 0.0
        %637 = vmatprep.subr.mxu0 0.0
        %638 = vmatpush2.msra.mxu0 0.0
        %639 = vmatprep.subr.mxu0 0.0
        %640 = vmatpush2.msra.mxu0 0.0
        %641 = vmatprep.subr.mxu0 0.0
        %642 = vmatpush2.msra.mxu0 0.0
        %643 = vmatprep.subr.mxu0 0.0
        %644 = vmatpush2.msra.mxu0 0.0
        %645 = vmatprep.subr.mxu0 0.0
        %646 = vmatpush2.msra.mxu0 0.0
        %647 = vmatprep.subr.mxu0 0.0
        %648 = vmatpush2.msra.mxu0 0.0
        %649 = vmatprep.subr.mxu0 0.0
        %650 = vmatpush2.msra.mxu0 0.0
        %651 = vmatprep.subr.mxu0 0.0
        %652 = vmatpush2.msra.mxu0 0.0
        %653 = vmatprep.subr.mxu0 0.0
        %654 = vmatpush2.msra.mxu0 0.0
        %655 = vmatprep.subr.mxu0 0.0
        %656 = vmatpush2.msra.mxu0 0.0
        %657 = vmatprep.subr.mxu0 0.0
        %658 = vmatpush2.msra.mxu0 0.0
        %659 = vmatprep.subr.mxu0 0.0
        %660 = vmatpush2.msra.mxu0 0.0
        %661 = vmatprep.subr.mxu0 0.0
        %662 = vmatpush2.msra.mxu0 0.0
        %663 = vmatprep.subr.mxu0 0.0
        %664 = vmatpush2.msra.mxu0 0.0
        %665 = vmatprep.subr.mxu0 0.0
        %666 = vmatpush2.msra.mxu0 0.0
        %667 = vmatprep.mubr.f32.mxu0 0.0
        %668 = vmatmul.mubr.f32.gmra.mxu0 %v595
        %v669 = vpop.f32.mrf.mxu0
        %v670 = vadd.f32 %v592, %v669
        %v671 = vpop.f32.mrf.mxu0
        %v672 = vadd.f32 %v592, %v671
        %673 = vdwg.mxu0
        %v674 = vxor.u32 %v670, 2147483648
        %v675 = vxor.u32 %v672, 2147483648
        %v676 = vmul.f32 %v674, 1.442695
        %v677 = vpow.pop %v676
        %v678 = vmul.f32 %v675, 1.442695
        %v679 = vpow.pop %v678
        %v680 = vadd.f32 %v677, 1.0
        %v681 = vadd.f32 %v679, 1.0
        %v682 = vrcp.pop %v680
        %v683 = vmul.f32 1.0, %v682
        %v684 = vrcp.pop %v681
        %v685 = vmul.f32 1.0, %v684
        %686 = vst [vmem:[%s258 + $0x10] sm:$0xf] %v683
        %687 = vst [vmem:[%s258 + $0x18] sm:$0xf] %v685
        %s688 = scalar_lea.vmem %s267, 3
        %v689 = vld [vmem:[%s688] ss:$4 sm:$0x3]
        %v691 = vlaneseq
        %v692 = vshrl.u32 %v691, 7
        %v693 = vsub.s32 0, %v692
        %v694 = vrot.slane %v689, %v693
        %v695 = vlaneseq
        %v696 = vshrl.u32 %v695, 7
        %v697 = vsub.s32 1, %v696
        %v698 = vrot.slane %v689, %v697
        %v701 = vmul.f32 %v694, %v569
        %v702 = vmul.f32 %v698, %v569
        %v703 = vld [vmem:[%s273 + $0x10] sm:$0xf0]
        %v704 = vld [vmem:[%s273 + $0x18] sm:$0xf0]
        %v705 = vadd.f32 %v701, %v703
        %v706 = vadd.f32 %v702, %v704
        %v707 = vxor.u32 %v705, 2147483648
        %v708 = vxor.u32 %v706, 2147483648
        %v709 = vmul.f32 %v707, 1.442695
        %v710 = vpow.pop %v709
        %v711 = vmul.f32 %v708, 1.442695
        %v712 = vpow.pop %v711
        %v713 = vadd.f32 %v710, 1.0
        %v714 = vadd.f32 %v712, 1.0
        %v715 = vrcp.pop %v713
        %v716 = vmul.f32 1.0, %v715
        %v717 = vrcp.pop %v714
        %v718 = vmul.f32 1.0, %v717
        %v719 = vrot.slane %v277, 4
        %v722 = vrot.slane %v716, 4
        %v723 = vrot.slane %v718, 4
        %v724 = vrot.slane %v592, 4
        %v726 = vsel %vm322, %v719, 0
        %v728 = vsel %vm326, %v722, 0
        %v730 = vsel %vm326, %v723, 0
        %732 = vmatprep.subr.mxu0 0.0
        %733 = vmatpush1.msra.mxu0 0.0
        %734 = vmatprep.subr.mxu0 0.0
        %735 = vmatpush1.msra.mxu0 0.0
        %736 = vmatprep.subr.mxu0 0.0
        %737 = vmatpush1.msra.mxu0 0.0
        %738 = vmatprep.subr.mxu0 0.0
        %739 = vmatpush1.msra.mxu0 0.0
        %740 = vmatprep.subr.mxu0 0.0
        %741 = vmatpush1.msra.mxu0 0.0
        %742 = vmatprep.subr.mxu0 0.0
        %743 = vmatpush1.msra.mxu0 0.0
        %744 = vmatprep.subr.mxu0 0.0
        %745 = vmatpush1.msra.mxu0 0.0
        %746 = vmatprep.subr.mxu0 0.0
        %747 = vmatpush1.msra.mxu0 0.0
        %748 = vmatprep.subr.mxu0 0.0
        %749 = vmatpush1.msra.mxu0 0.0
        %750 = vmatprep.subr.mxu0 0.0
        %751 = vmatpush1.msra.mxu0 0.0
        %752 = vmatprep.subr.mxu0 0.0
        %753 = vmatpush1.msra.mxu0 0.0
        %754 = vmatprep.subr.mxu0 0.0
        %755 = vmatpush1.msra.mxu0 0.0
        %756 = vmatprep.subr.mxu0 0.0
        %757 = vmatpush1.msra.mxu0 0.0
        %758 = vmatprep.subr.mxu0 0.0
        %759 = vmatpush1.msra.mxu0 0.0
        %760 = vmatprep.subr.mxu0 0.0
        %761 = vmatpush1.msra.mxu0 0.0
        %762 = vmatprep.subr.mxu0 %v730
        %763 = vmatpush1.msra.mxu0 %v728
        %764 = vmatprep.subr.mxu0 0.0
        %765 = vmatpush2.msra.mxu0 0.0
        %766 = vmatprep.subr.mxu0 0.0
        %767 = vmatpush2.msra.mxu0 0.0
        %768 = vmatprep.subr.mxu0 0.0
        %769 = vmatpush2.msra.mxu0 0.0
        %770 = vmatprep.subr.mxu0 0.0
        %771 = vmatpush2.msra.mxu0 0.0
        %772 = vmatprep.subr.mxu0 0.0
        %773 = vmatpush2.msra.mxu0 0.0
        %774 = vmatprep.subr.mxu0 0.0
        %775 = vmatpush2.msra.mxu0 0.0
        %776 = vmatprep.subr.mxu0 0.0
        %777 = vmatpush2.msra.mxu0 0.0
        %778 = vmatprep.subr.mxu0 0.0
        %779 = vmatpush2.msra.mxu0 0.0
        %780 = vmatprep.subr.mxu0 0.0
        %781 = vmatpush2.msra.mxu0 0.0
        %782 = vmatprep.subr.mxu0 0.0
        %783 = vmatpush2.msra.mxu0 0.0
        %784 = vmatprep.subr.mxu0 0.0
        %785 = vmatpush2.msra.mxu0 0.0
        %786 = vmatprep.subr.mxu0 0.0
        %787 = vmatpush2.msra.mxu0 0.0
        %788 = vmatprep.subr.mxu0 0.0
        %789 = vmatpush2.msra.mxu0 0.0
        %790 = vmatprep.subr.mxu0 0.0
        %791 = vmatpush2.msra.mxu0 0.0
        %792 = vmatprep.subr.mxu0 0.0
        %793 = vmatpush2.msra.mxu0 0.0
        %794 = vmatprep.subr.mxu0 0.0
        %795 = vmatpush2.msra.mxu0 0.0
        %796 = vmatprep.mubr.f32.mxu0 0.0
        %797 = vmatmul.mubr.f32.gmra.mxu0 %v726
        %v798 = vpop.f32.mrf.mxu0
        %v799 = vadd.f32 %v724, %v798
        %v800 = vpop.f32.mrf.mxu0
        %v801 = vadd.f32 %v724, %v800
        %802 = vdwg.mxu0
        %v803 = vxor.u32 %v799, 2147483648
        %v804 = vxor.u32 %v801, 2147483648
        %v805 = vmul.f32 %v803, 1.442695
        %v806 = vpow.pop %v805
        %v807 = vmul.f32 %v804, 1.442695
        %v808 = vpow.pop %v807
        %v809 = vadd.f32 %v806, 1.0
        %v810 = vadd.f32 %v808, 1.0
        %v811 = vrcp.pop %v809
        %v812 = vmul.f32 1.0, %v811
        %v813 = vrcp.pop %v810
        %v814 = vmul.f32 1.0, %v813
        %v817 = vrot.slane %v812, 4
        %v818 = vrot.slane %v814, 4
        %821 = vst [vmem:[%s258 + $0x10] sm:$0xf0] %v817
        %822 = vst [vmem:[%s258 + $0x18] sm:$0xf0] %v818
        %s823 = sand.u32 %s158, 1
        %s824 = scalar_lea.sflag [#allocation3], %s823
        %s825 = sand.u32 %s158, 1
        %s826 = smul.addr %s825, 32
        %s827 = scalar_lea.vmem [#allocation2], %s826
        // Predicated region
        $region41: #{tpu_custom_call.1} parent=39 // pred_check
          %p828 = pneg %p168
        $region42: #{tpu_custom_call.1} parent=39 // pred_check_branch
          %830 = sbr.rel (%p828) target = $region44
        $region43: #{tpu_custom_call.1} parent=39 // pred_region
          %s831 = smul.u32 2, %s23
          %s833 = ssub.s32 512, 512
          %834 = vsyncadd %s824, %s833
          %s835 = smul.addr %s24, 4
          %s836 = sadd.s32 %s831, %s835
          %s837 = smul.addr %s836, 128
          %s838 = scalar_lea.hbm %s5, %s837
          %s839 = sshll.u32 %s827, 4
          %s840 = int_to_ptr.vmem [resolvable:$true] %s839
          %845 = dma.vmem_to_hbm [thread:$0]  %s840, 512, %s838, %s824, 256, 256, 16
        $region44: #{tpu_custom_call.1} parent=39 // pred_fallthru
          _
      $region40: #{tpu_custom_call.1} parent=5 // pred_fallthru
        _
      %p846 = scmp.le.s32.totalorder 2, %s14
      // Predicated region
      $region45: #{tpu_custom_call.1} parent=5 // pred_check
        %p847 = pneg %p846
      $region46: #{tpu_custom_call.1} parent=5 // pred_check_branch
        %849 = sbr.rel (%p847) target = $region48
      $region47: #{tpu_custom_call.1} parent=5 // pred_region
        %s850 = ssub.s32 %s14, 2
        // Predicated region
        $region49: #{tpu_custom_call.1} parent=47 // pred_check
          %p851 = pneg %p174
        $region50: #{tpu_custom_call.1} parent=47 // pred_check_branch
          %853 = sbr.rel (%p851) target = $region52
        $region51: #{tpu_custom_call.1} parent=47 // pred_region
          %s854 = sand.u32 %s159, 1
          %s855 = scalar_lea.sflag [#allocation3], %s854
          %s856 = sand.u32 %s159, 1
          %s857 = smul.addr %s856, 32
          %s858 = scalar_lea.vmem [#allocation2], %s857
          %859 = dma.done %s855, 512
        $region52: #{tpu_custom_call.1} parent=47 // pred_fallthru
          _
      $region48: #{tpu_custom_call.1} parent=5 // pred_fallthru
        _
    $region6: #{tpu_custom_call.1} parent=1 // loop_footer
      %s18 = sadd.s32 1, %s14
    $region7: #{tpu_custom_call.1} parent=1 // loop_footer_branch
      %13 = sbr.rel target = $region3
    $region8: #{tpu_custom_call.1} parent=1 // loop_exit
      _
    %860 = vsyncpa [#allocation3], 1
    %s861 = scalar_lea.sflag [#allocation3], 1
    %862 = vsyncpa %s861, 1

</llo_original>
